<compile_context>
chip_gen: v6e
topology: v6e:2x2x1
jax: 0.10.0
libtpu: 0.0.40
codegen_flags: <defaults>
</compile_context>

<pallas_src>
import jax
import jax.numpy as jnp
from jax.experimental import pallas as pl
from jax.experimental.pallas import tpu as pltpu


# Offsets into the packed parameter vector (see _pack_params).
_W1, _B1 = 0, 20          # w1: (10, 2) row-major, b1: (10,)
_W2, _B2 = 30, 130        # w2: (10, 10) row-major, b2: (10,)
_W3, _B3 = 140, 150       # w3: (10,),  b3: (1,)
_NPARAM = 151

_H1 = 10                  # hidden width of layer 1
_H2 = 10                  # hidden width of layer 2

_CHUNK = 256              # lanes per inner chunk (keeps ~30 vregs live, hides sld)


def _mlp_kernel(p_ref, x_ref, o_ref):
    """Fused 2->10->10->1 MLP on one lane-dense batch tile.

    p_ref : (151,) f32 in SMEM     -- packed weights/biases, read as scalars.
    x_ref : (2, 8, cols) f32 VMEM  -- two input features; batch on (sublane, lane).
    o_ref : (8, cols) f32 VMEM     -- lane-dense output tile.
    """
    cols = o_ref.shape[-1]
    n_chunks = cols // _CHUNK          # static (cols is a multiple of _CHUNK)

    # Hoist all scalar parameter reads above the chunk loop (loop-invariant).
    w1 = [p_ref[_W1 + i] for i in range(2 * _H1)]
    b1 = [p_ref[_B1 + i] for i in range(_H1)]
    w2 = [p_ref[_W2 + i] for i in range(_H1 * _H2)]
    b2 = [p_ref[_B2 + i] for i in range(_H2)]
    w3 = [p_ref[_W3 + i] for i in range(_H2)]
    b3 = p_ref[_B3]

    @pl.loop(0, n_chunks)
    def _(c):
        lo = pl.multiple_of(c * _CHUNK, _CHUNK)
        x0 = x_ref[0, :, pl.ds(lo, _CHUNK)]          # (8, _CHUNK) feature 0
        x1 = x_ref[1, :, pl.ds(lo, _CHUNK)]          # (8, _CHUNK) feature 1

        # Layer 1: 2 -> 10, ReLU. h1[0..9] stay vreg-resident (20 vregs @ 256 lanes).
        h1 = []
        for j in range(_H1):
            v = w1[2 * j] * x0 + w1[2 * j + 1] * x1 + b1[j]
            h1.append(jnp.maximum(v, 0.0))

        # Layers 2 + 3 fused: accumulate the layer-3 output as each h2[j] is
        # produced, so only one layer-2 accumulator is live at a time.
        out = None
        for j in range(_H2):
            acc = w2[_H1 * j] * h1[0]
            for k in range(1, _H1):
                acc = acc + w2[_H1 * j + k] * h1[k]
            h2j = jnp.maximum(acc + b2[j], 0.0)
            term = w3[j] * h2j
            out = term if out is None else out + term

        o_ref[:, pl.ds(lo, _CHUNK)] = (out + b3).astype(o_ref.dtype)


def _pack_params(params):
    """Pack all weights/biases (PyTorch nn.Linear layout) into one flat f32 vector."""
    return jnp.concatenate([
        params["w1"].reshape(-1).astype(jnp.float32),   # (20,)  w1[j,k] at 2j+k
        params["b1"].reshape(-1).astype(jnp.float32),    # (10,)
        params["w2"].reshape(-1).astype(jnp.float32),    # (100,) w2[j,k] at 10j+k
        params["b2"].reshape(-1).astype(jnp.float32),    # (10,)
        params["w3"].reshape(-1).astype(jnp.float32),    # (10,)
        params["b3"].reshape(-1).astype(jnp.float32),    # (1,)
    ])                                                   # total 151


def circle_classification0(x, params, *, max_block_cols=8192, min_steps=4):
    """x: (B, 2) float32; params in PyTorch nn.Linear layout. Returns (B, 1)."""
    B = x.shape[0]
    assert x.shape[1] == 2
    assert max_block_cols % _CHUNK == 0

    # Pick cols as large as possible (amortize per-grid-step overhead) but keep
    # at least ~min_steps grid steps when B is big enough (so v7x's 2 TCs both
    # get work via the "parallel" grid axis). cols is a multiple of _CHUNK.
    target_cols = pl.cdiv(B, 8 * min_steps)
    cols = min(max_block_cols, max(_CHUNK, _CHUNK * pl.cdiv(target_cols, _CHUNK)))
    block = 8 * cols
    n_steps = pl.cdiv(B, block)
    b_pad = n_steps * block
    r_total = 8 * n_steps

    # Transpose first, then pad (single relayout pass; no extra HBM passes).
    # Sample n lives at xt[:, n // cols, n % cols].
    xt = jnp.pad(x.astype(jnp.float32).T, ((0, 0), (0, b_pad - B))).reshape(
        2, r_total, cols)

    packed = _pack_params(params)                        # (151,) -> SMEM

    out2d = pl.pallas_call(
        _mlp_kernel,
        out_shape=jax.ShapeDtypeStruct((r_total, cols), jnp.float32),
        grid=(n_steps,),
        in_specs=[
            # All parameters: one small array, whole-array, resident in SMEM.
            pl.BlockSpec(memory_space=pltpu.MemorySpace.SMEM),
            # Input features: (2, 8, cols) tile per step, batch on (sublane, lane).
            pl.BlockSpec((2, 8, cols), lambda i: (0, i, 0)),
        ],
        # Lane-dense output tile -> wide unmasked stores.
        out_specs=pl.BlockSpec((8, cols), lambda i: (i, 0)),
        compiler_params=pltpu.CompilerParams(
            dimension_semantics=("parallel",),   # batch axis: shard across TCs on v7x
        ),
    )(packed, xt)

    # Back to the PyTorch (B, 1) output layout; padded tail samples are dropped.
    return out2d.reshape(b_pad)[:B, None].astype(x.dtype)


def init_params(key):
    """Deterministic parameter init matching nn.Linear shapes (PyTorch layout)."""
    ks = jax.random.split(key, 6)

    def uinit(k, shape, fan_in):
        bound = 1.0 / jnp.sqrt(fan_in)
        return jax.random.uniform(k, shape, jnp.float32, -bound, bound)

    return {
        "w1": uinit(ks[0], (10, 2), 2.0),
        "b1": uinit(ks[1], (10,), 2.0),
        "w2": uinit(ks[2], (10, 10), 10.0),
        "b2": uinit(ks[3], (10,), 10.0),
        "w3": uinit(ks[4], (1, 10), 10.0),
        "b3": uinit(ks[5], (1,), 10.0),
    }


def reference_forward(x, p):
    h1 = jnp.maximum(x @ p["w1"].T + p["b1"], 0.0)
    h2 = jnp.maximum(h1 @ p["w2"].T + p["b2"], 0.0)
    return h2 @ p["w3"].T + p["b3"]


if __name__ == "__main__":
    key = jax.random.PRNGKey(0)
    k_params, k_x1, k_x2 = jax.random.split(key, 3)

    params = init_params(k_params)

    # Small primary test: batch=8, 2 input features.
    x_small = jax.random.normal(k_x1, (8, 2), dtype=jnp.float32)
    out_small = jax.block_until_ready(circle_classification0(x_small, params))
    ref_small = reference_forward(x_small, params)
    assert out_small.shape == (8, 1), out_small.shape
    assert jnp.allclose(out_small, ref_small, atol=1e-5, rtol=1e-5), \
        "mismatch vs reference (batch=8)"

    # Secondary test exercising the padded tail (non-multiple batch).
    x_odd = jax.random.normal(k_x2, (300, 2), dtype=jnp.float32)
    out_odd = jax.block_until_ready(circle_classification0(x_odd, params))
    ref_odd = reference_forward(x_odd, params)
    assert out_odd.shape == (300, 1), out_odd.shape
    assert jnp.allclose(out_odd, ref_odd, atol=1e-5, rtol=1e-5), \
        "mismatch vs reference (batch=300)"

    print("KERNEL_OK")
</pallas_src>

<mosaic_0001>
module attributes {stable_mosaic.version = 11 : i64} {
  func.func @_mlp_kernel(%arg0: i32, %arg1: memref<151xf32, #tpu.memory_space<smem>>, %arg2: memref<2x8x256xf32, #tpu.memory_space<vmem>>, %arg3: memref<8x256xf32, #tpu.memory_space<vmem>>) attributes {dimension_semantics = [#tpu.dimension_semantics<parallel>], iteration_bounds = array<i64: 1>, scalar_prefetch = 0 : i64, scratch_operands = 0 : i64, tpu.core_type = #tpu.core_type<tc>, window_params = [{transform_indices = @transform_0, window_bounds = array<i64: 151>}, {transform_indices = @transform_1, window_bounds = array<i64: 2, 8, 256>}, {transform_indices = @transform_2, window_bounds = array<i64: 8, 256>}]} {
    %c0 = arith.constant 0 : index
    %0 = memref.load %arg1[%c0] : memref<151xf32, #tpu.memory_space<smem>>
    %c1 = arith.constant 1 : index
    %1 = memref.load %arg1[%c1] : memref<151xf32, #tpu.memory_space<smem>>
    %c2 = arith.constant 2 : index
    %2 = memref.load %arg1[%c2] : memref<151xf32, #tpu.memory_space<smem>>
    %c3 = arith.constant 3 : index
    %3 = memref.load %arg1[%c3] : memref<151xf32, #tpu.memory_space<smem>>
    %c4 = arith.constant 4 : index
    %4 = memref.load %arg1[%c4] : memref<151xf32, #tpu.memory_space<smem>>
    %c5 = arith.constant 5 : index
    %5 = memref.load %arg1[%c5] : memref<151xf32, #tpu.memory_space<smem>>
    %c6 = arith.constant 6 : index
    %6 = memref.load %arg1[%c6] : memref<151xf32, #tpu.memory_space<smem>>
    %c7 = arith.constant 7 : index
    %7 = memref.load %arg1[%c7] : memref<151xf32, #tpu.memory_space<smem>>
    %c8 = arith.constant 8 : index
    %8 = memref.load %arg1[%c8] : memref<151xf32, #tpu.memory_space<smem>>
    %c9 = arith.constant 9 : index
    %9 = memref.load %arg1[%c9] : memref<151xf32, #tpu.memory_space<smem>>
    %c10 = arith.constant 10 : index
    %10 = memref.load %arg1[%c10] : memref<151xf32, #tpu.memory_space<smem>>
    %c11 = arith.constant 11 : index
    %11 = memref.load %arg1[%c11] : memref<151xf32, #tpu.memory_space<smem>>
    %c12 = arith.constant 12 : index
    %12 = memref.load %arg1[%c12] : memref<151xf32, #tpu.memory_space<smem>>
    %c13 = arith.constant 13 : index
    %13 = memref.load %arg1[%c13] : memref<151xf32, #tpu.memory_space<smem>>
    %c14 = arith.constant 14 : index
    %14 = memref.load %arg1[%c14] : memref<151xf32, #tpu.memory_space<smem>>
    %c15 = arith.constant 15 : index
    %15 = memref.load %arg1[%c15] : memref<151xf32, #tpu.memory_space<smem>>
    %c16 = arith.constant 16 : index
    %16 = memref.load %arg1[%c16] : memref<151xf32, #tpu.memory_space<smem>>
    %c17 = arith.constant 17 : index
    %17 = memref.load %arg1[%c17] : memref<151xf32, #tpu.memory_space<smem>>
    %c18 = arith.constant 18 : index
    %18 = memref.load %arg1[%c18] : memref<151xf32, #tpu.memory_space<smem>>
    %c19 = arith.constant 19 : index
    %19 = memref.load %arg1[%c19] : memref<151xf32, #tpu.memory_space<smem>>
    %c20 = arith.constant 20 : index
    %20 = memref.load %arg1[%c20] : memref<151xf32, #tpu.memory_space<smem>>
    %c21 = arith.constant 21 : index
    %21 = memref.load %arg1[%c21] : memref<151xf32, #tpu.memory_space<smem>>
    %c22 = arith.constant 22 : index
    %22 = memref.load %arg1[%c22] : memref<151xf32, #tpu.memory_space<smem>>
    %c23 = arith.constant 23 : index
    %23 = memref.load %arg1[%c23] : memref<151xf32, #tpu.memory_space<smem>>
    %c24 = arith.constant 24 : index
    %24 = memref.load %arg1[%c24] : memref<151xf32, #tpu.memory_space<smem>>
    %c25 = arith.constant 25 : index
    %25 = memref.load %arg1[%c25] : memref<151xf32, #tpu.memory_space<smem>>
    %c26 = arith.constant 26 : index
    %26 = memref.load %arg1[%c26] : memref<151xf32, #tpu.memory_space<smem>>
    %c27 = arith.constant 27 : index
    %27 = memref.load %arg1[%c27] : memref<151xf32, #tpu.memory_space<smem>>
    %c28 = arith.constant 28 : index
    %28 = memref.load %arg1[%c28] : memref<151xf32, #tpu.memory_space<smem>>
    %c29 = arith.constant 29 : index
    %29 = memref.load %arg1[%c29] : memref<151xf32, #tpu.memory_space<smem>>
    %c30 = arith.constant 30 : index
    %30 = memref.load %arg1[%c30] : memref<151xf32, #tpu.memory_space<smem>>
    %c31 = arith.constant 31 : index
    %31 = memref.load %arg1[%c31] : memref<151xf32, #tpu.memory_space<smem>>
    %c32 = arith.constant 32 : index
    %32 = memref.load %arg1[%c32] : memref<151xf32, #tpu.memory_space<smem>>
    %c33 = arith.constant 33 : index
    %33 = memref.load %arg1[%c33] : memref<151xf32, #tpu.memory_space<smem>>
    %c34 = arith.constant 34 : index
    %34 = memref.load %arg1[%c34] : memref<151xf32, #tpu.memory_space<smem>>
    %c35 = arith.constant 35 : index
    %35 = memref.load %arg1[%c35] : memref<151xf32, #tpu.memory_space<smem>>
    %c36 = arith.constant 36 : index
    %36 = memref.load %arg1[%c36] : memref<151xf32, #tpu.memory_space<smem>>
    %c37 = arith.constant 37 : index
    %37 = memref.load %arg1[%c37] : memref<151xf32, #tpu.memory_space<smem>>
    %c38 = arith.constant 38 : index
    %38 = memref.load %arg1[%c38] : memref<151xf32, #tpu.memory_space<smem>>
    %c39 = arith.constant 39 : index
    %39 = memref.load %arg1[%c39] : memref<151xf32, #tpu.memory_space<smem>>
    %c40 = arith.constant 40 : index
    %40 = memref.load %arg1[%c40] : memref<151xf32, #tpu.memory_space<smem>>
    %c41 = arith.constant 41 : index
    %41 = memref.load %arg1[%c41] : memref<151xf32, #tpu.memory_space<smem>>
    %c42 = arith.constant 42 : index
    %42 = memref.load %arg1[%c42] : memref<151xf32, #tpu.memory_space<smem>>
    %c43 = arith.constant 43 : index
    %43 = memref.load %arg1[%c43] : memref<151xf32, #tpu.memory_space<smem>>
    %c44 = arith.constant 44 : index
    %44 = memref.load %arg1[%c44] : memref<151xf32, #tpu.memory_space<smem>>
    %c45 = arith.constant 45 : index
    %45 = memref.load %arg1[%c45] : memref<151xf32, #tpu.memory_space<smem>>
    %c46 = arith.constant 46 : index
    %46 = memref.load %arg1[%c46] : memref<151xf32, #tpu.memory_space<smem>>
    %c47 = arith.constant 47 : index
    %47 = memref.load %arg1[%c47] : memref<151xf32, #tpu.memory_space<smem>>
    %c48 = arith.constant 48 : index
    %48 = memref.load %arg1[%c48] : memref<151xf32, #tpu.memory_space<smem>>
    %c49 = arith.constant 49 : index
    %49 = memref.load %arg1[%c49] : memref<151xf32, #tpu.memory_space<smem>>
    %c50 = arith.constant 50 : index
    %50 = memref.load %arg1[%c50] : memref<151xf32, #tpu.memory_space<smem>>
    %c51 = arith.constant 51 : index
    %51 = memref.load %arg1[%c51] : memref<151xf32, #tpu.memory_space<smem>>
    %c52 = arith.constant 52 : index
    %52 = memref.load %arg1[%c52] : memref<151xf32, #tpu.memory_space<smem>>
    %c53 = arith.constant 53 : index
    %53 = memref.load %arg1[%c53] : memref<151xf32, #tpu.memory_space<smem>>
    %c54 = arith.constant 54 : index
    %54 = memref.load %arg1[%c54] : memref<151xf32, #tpu.memory_space<smem>>
    %c55 = arith.constant 55 : index
    %55 = memref.load %arg1[%c55] : memref<151xf32, #tpu.memory_space<smem>>
    %c56 = arith.constant 56 : index
    %56 = memref.load %arg1[%c56] : memref<151xf32, #tpu.memory_space<smem>>
    %c57 = arith.constant 57 : index
    %57 = memref.load %arg1[%c57] : memref<151xf32, #tpu.memory_space<smem>>
    %c58 = arith.constant 58 : index
    %58 = memref.load %arg1[%c58] : memref<151xf32, #tpu.memory_space<smem>>
    %c59 = arith.constant 59 : index
    %59 = memref.load %arg1[%c59] : memref<151xf32, #tpu.memory_space<smem>>
    %c60 = arith.constant 60 : index
    %60 = memref.load %arg1[%c60] : memref<151xf32, #tpu.memory_space<smem>>
    %c61 = arith.constant 61 : index
    %61 = memref.load %arg1[%c61] : memref<151xf32, #tpu.memory_space<smem>>
    %c62 = arith.constant 62 : index
    %62 = memref.load %arg1[%c62] : memref<151xf32, #tpu.memory_space<smem>>
    %c63 = arith.constant 63 : index
    %63 = memref.load %arg1[%c63] : memref<151xf32, #tpu.memory_space<smem>>
    %c64 = arith.constant 64 : index
    %64 = memref.load %arg1[%c64] : memref<151xf32, #tpu.memory_space<smem>>
    %c65 = arith.constant 65 : index
    %65 = memref.load %arg1[%c65] : memref<151xf32, #tpu.memory_space<smem>>
    %c66 = arith.constant 66 : index
    %66 = memref.load %arg1[%c66] : memref<151xf32, #tpu.memory_space<smem>>
    %c67 = arith.constant 67 : index
    %67 = memref.load %arg1[%c67] : memref<151xf32, #tpu.memory_space<smem>>
    %c68 = arith.constant 68 : index
    %68 = memref.load %arg1[%c68] : memref<151xf32, #tpu.memory_space<smem>>
    %c69 = arith.constant 69 : index
    %69 = memref.load %arg1[%c69] : memref<151xf32, #tpu.memory_space<smem>>
    %c70 = arith.constant 70 : index
    %70 = memref.load %arg1[%c70] : memref<151xf32, #tpu.memory_space<smem>>
    %c71 = arith.constant 71 : index
    %71 = memref.load %arg1[%c71] : memref<151xf32, #tpu.memory_space<smem>>
    %c72 = arith.constant 72 : index
    %72 = memref.load %arg1[%c72] : memref<151xf32, #tpu.memory_space<smem>>
    %c73 = arith.constant 73 : index
    %73 = memref.load %arg1[%c73] : memref<151xf32, #tpu.memory_space<smem>>
    %c74 = arith.constant 74 : index
    %74 = memref.load %arg1[%c74] : memref<151xf32, #tpu.memory_space<smem>>
    %c75 = arith.constant 75 : index
    %75 = memref.load %arg1[%c75] : memref<151xf32, #tpu.memory_space<smem>>
    %c76 = arith.constant 76 : index
    %76 = memref.load %arg1[%c76] : memref<151xf32, #tpu.memory_space<smem>>
    %c77 = arith.constant 77 : index
    %77 = memref.load %arg1[%c77] : memref<151xf32, #tpu.memory_space<smem>>
    %c78 = arith.constant 78 : index
    %78 = memref.load %arg1[%c78] : memref<151xf32, #tpu.memory_space<smem>>
    %c79 = arith.constant 79 : index
    %79 = memref.load %arg1[%c79] : memref<151xf32, #tpu.memory_space<smem>>
    %c80 = arith.constant 80 : index
    %80 = memref.load %arg1[%c80] : memref<151xf32, #tpu.memory_space<smem>>
    %c81 = arith.constant 81 : index
    %81 = memref.load %arg1[%c81] : memref<151xf32, #tpu.memory_space<smem>>
    %c82 = arith.constant 82 : index
    %82 = memref.load %arg1[%c82] : memref<151xf32, #tpu.memory_space<smem>>
    %c83 = arith.constant 83 : index
    %83 = memref.load %arg1[%c83] : memref<151xf32, #tpu.memory_space<smem>>
    %c84 = arith.constant 84 : index
    %84 = memref.load %arg1[%c84] : memref<151xf32, #tpu.memory_space<smem>>
    %c85 = arith.constant 85 : index
    %85 = memref.load %arg1[%c85] : memref<151xf32, #tpu.memory_space<smem>>
    %c86 = arith.constant 86 : index
    %86 = memref.load %arg1[%c86] : memref<151xf32, #tpu.memory_space<smem>>
    %c87 = arith.constant 87 : index
    %87 = memref.load %arg1[%c87] : memref<151xf32, #tpu.memory_space<smem>>
    %c88 = arith.constant 88 : index
    %88 = memref.load %arg1[%c88] : memref<151xf32, #tpu.memory_space<smem>>
    %c89 = arith.constant 89 : index
    %89 = memref.load %arg1[%c89] : memref<151xf32, #tpu.memory_space<smem>>
    %c90 = arith.constant 90 : index
    %90 = memref.load %arg1[%c90] : memref<151xf32, #tpu.memory_space<smem>>
    %c91 = arith.constant 91 : index
    %91 = memref.load %arg1[%c91] : memref<151xf32, #tpu.memory_space<smem>>
    %c92 = arith.constant 92 : index
    %92 = memref.load %arg1[%c92] : memref<151xf32, #tpu.memory_space<smem>>
    %c93 = arith.constant 93 : index
    %93 = memref.load %arg1[%c93] : memref<151xf32, #tpu.memory_space<smem>>
    %c94 = arith.constant 94 : index
    %94 = memref.load %arg1[%c94] : memref<151xf32, #tpu.memory_space<smem>>
    %c95 = arith.constant 95 : index
    %95 = memref.load %arg1[%c95] : memref<151xf32, #tpu.memory_space<smem>>
    %c96 = arith.constant 96 : index
    %96 = memref.load %arg1[%c96] : memref<151xf32, #tpu.memory_space<smem>>
    %c97 = arith.constant 97 : index
    %97 = memref.load %arg1[%c97] : memref<151xf32, #tpu.memory_space<smem>>
    %c98 = arith.constant 98 : index
    %98 = memref.load %arg1[%c98] : memref<151xf32, #tpu.memory_space<smem>>
    %c99 = arith.constant 99 : index
    %99 = memref.load %arg1[%c99] : memref<151xf32, #tpu.memory_space<smem>>
    %c100 = arith.constant 100 : index
    %100 = memref.load %arg1[%c100] : memref<151xf32, #tpu.memory_space<smem>>
    %c101 = arith.constant 101 : index
    %101 = memref.load %arg1[%c101] : memref<151xf32, #tpu.memory_space<smem>>
    %c102 = arith.constant 102 : index
    %102 = memref.load %arg1[%c102] : memref<151xf32, #tpu.memory_space<smem>>
    %c103 = arith.constant 103 : index
    %103 = memref.load %arg1[%c103] : memref<151xf32, #tpu.memory_space<smem>>
    %c104 = arith.constant 104 : index
    %104 = memref.load %arg1[%c104] : memref<151xf32, #tpu.memory_space<smem>>
    %c105 = arith.constant 105 : index
    %105 = memref.load %arg1[%c105] : memref<151xf32, #tpu.memory_space<smem>>
    %c106 = arith.constant 106 : index
    %106 = memref.load %arg1[%c106] : memref<151xf32, #tpu.memory_space<smem>>
    %c107 = arith.constant 107 : index
    %107 = memref.load %arg1[%c107] : memref<151xf32, #tpu.memory_space<smem>>
    %c108 = arith.constant 108 : index
    %108 = memref.load %arg1[%c108] : memref<151xf32, #tpu.memory_space<smem>>
    %c109 = arith.constant 109 : index
    %109 = memref.load %arg1[%c109] : memref<151xf32, #tpu.memory_space<smem>>
    %c110 = arith.constant 110 : index
    %110 = memref.load %arg1[%c110] : memref<151xf32, #tpu.memory_space<smem>>
    %c111 = arith.constant 111 : index
    %111 = memref.load %arg1[%c111] : memref<151xf32, #tpu.memory_space<smem>>
    %c112 = arith.constant 112 : index
    %112 = memref.load %arg1[%c112] : memref<151xf32, #tpu.memory_space<smem>>
    %c113 = arith.constant 113 : index
    %113 = memref.load %arg1[%c113] : memref<151xf32, #tpu.memory_space<smem>>
    %c114 = arith.constant 114 : index
    %114 = memref.load %arg1[%c114] : memref<151xf32, #tpu.memory_space<smem>>
    %c115 = arith.constant 115 : index
    %115 = memref.load %arg1[%c115] : memref<151xf32, #tpu.memory_space<smem>>
    %c116 = arith.constant 116 : index
    %116 = memref.load %arg1[%c116] : memref<151xf32, #tpu.memory_space<smem>>
    %c117 = arith.constant 117 : index
    %117 = memref.load %arg1[%c117] : memref<151xf32, #tpu.memory_space<smem>>
    %c118 = arith.constant 118 : index
    %118 = memref.load %arg1[%c118] : memref<151xf32, #tpu.memory_space<smem>>
    %c119 = arith.constant 119 : index
    %119 = memref.load %arg1[%c119] : memref<151xf32, #tpu.memory_space<smem>>
    %c120 = arith.constant 120 : index
    %120 = memref.load %arg1[%c120] : memref<151xf32, #tpu.memory_space<smem>>
    %c121 = arith.constant 121 : index
    %121 = memref.load %arg1[%c121] : memref<151xf32, #tpu.memory_space<smem>>
    %c122 = arith.constant 122 : index
    %122 = memref.load %arg1[%c122] : memref<151xf32, #tpu.memory_space<smem>>
    %c123 = arith.constant 123 : index
    %123 = memref.load %arg1[%c123] : memref<151xf32, #tpu.memory_space<smem>>
    %c124 = arith.constant 124 : index
    %124 = memref.load %arg1[%c124] : memref<151xf32, #tpu.memory_space<smem>>
    %c125 = arith.constant 125 : index
    %125 = memref.load %arg1[%c125] : memref<151xf32, #tpu.memory_space<smem>>
    %c126 = arith.constant 126 : index
    %126 = memref.load %arg1[%c126] : memref<151xf32, #tpu.memory_space<smem>>
    %c127 = arith.constant 127 : index
    %127 = memref.load %arg1[%c127] : memref<151xf32, #tpu.memory_space<smem>>
    %c128 = arith.constant 128 : index
    %128 = memref.load %arg1[%c128] : memref<151xf32, #tpu.memory_space<smem>>
    %c129 = arith.constant 129 : index
    %129 = memref.load %arg1[%c129] : memref<151xf32, #tpu.memory_space<smem>>
    %c130 = arith.constant 130 : index
    %130 = memref.load %arg1[%c130] : memref<151xf32, #tpu.memory_space<smem>>
    %c131 = arith.constant 131 : index
    %131 = memref.load %arg1[%c131] : memref<151xf32, #tpu.memory_space<smem>>
    %c132 = arith.constant 132 : index
    %132 = memref.load %arg1[%c132] : memref<151xf32, #tpu.memory_space<smem>>
    %c133 = arith.constant 133 : index
    %133 = memref.load %arg1[%c133] : memref<151xf32, #tpu.memory_space<smem>>
    %c134 = arith.constant 134 : index
    %134 = memref.load %arg1[%c134] : memref<151xf32, #tpu.memory_space<smem>>
    %c135 = arith.constant 135 : index
    %135 = memref.load %arg1[%c135] : memref<151xf32, #tpu.memory_space<smem>>
    %c136 = arith.constant 136 : index
    %136 = memref.load %arg1[%c136] : memref<151xf32, #tpu.memory_space<smem>>
    %c137 = arith.constant 137 : index
    %137 = memref.load %arg1[%c137] : memref<151xf32, #tpu.memory_space<smem>>
    %c138 = arith.constant 138 : index
    %138 = memref.load %arg1[%c138] : memref<151xf32, #tpu.memory_space<smem>>
    %c139 = arith.constant 139 : index
    %139 = memref.load %arg1[%c139] : memref<151xf32, #tpu.memory_space<smem>>
    %c140 = arith.constant 140 : index
    %140 = memref.load %arg1[%c140] : memref<151xf32, #tpu.memory_space<smem>>
    %c141 = arith.constant 141 : index
    %141 = memref.load %arg1[%c141] : memref<151xf32, #tpu.memory_space<smem>>
    %c142 = arith.constant 142 : index
    %142 = memref.load %arg1[%c142] : memref<151xf32, #tpu.memory_space<smem>>
    %c143 = arith.constant 143 : index
    %143 = memref.load %arg1[%c143] : memref<151xf32, #tpu.memory_space<smem>>
    %c144 = arith.constant 144 : index
    %144 = memref.load %arg1[%c144] : memref<151xf32, #tpu.memory_space<smem>>
    %c145 = arith.constant 145 : index
    %145 = memref.load %arg1[%c145] : memref<151xf32, #tpu.memory_space<smem>>
    %c146 = arith.constant 146 : index
    %146 = memref.load %arg1[%c146] : memref<151xf32, #tpu.memory_space<smem>>
    %c147 = arith.constant 147 : index
    %147 = memref.load %arg1[%c147] : memref<151xf32, #tpu.memory_space<smem>>
    %c148 = arith.constant 148 : index
    %148 = memref.load %arg1[%c148] : memref<151xf32, #tpu.memory_space<smem>>
    %c149 = arith.constant 149 : index
    %149 = memref.load %arg1[%c149] : memref<151xf32, #tpu.memory_space<smem>>
    %c150 = arith.constant 150 : index
    %150 = memref.load %arg1[%c150] : memref<151xf32, #tpu.memory_space<smem>>
    %c0_i32 = arith.constant 0 : i32
    %c1_i32 = arith.constant 1 : i32
    %151 = arith.muli %c0_i32, %c1_i32 : i32
    %c0_i32_0 = arith.constant 0 : i32
    %152 = arith.addi %c0_i32_0, %151 : i32
    %c256_i32 = arith.constant 256 : i32
    %153 = arith.muli %152, %c256_i32 : i32
    %154 = tpu.assume_multiple %153, 256 : i32
    %c0_1 = arith.constant 0 : index
    %c0_2 = arith.constant 0 : index
    %155 = arith.index_cast %154 : i32 to index
    %156 = vector.load %arg2[%c0_1, %c0_2, %155] : memref<2x8x256xf32, #tpu.memory_space<vmem>>, vector<1x8x256xf32>
    %157 = vector.shape_cast %156 : vector<1x8x256xf32> to vector<8x256xf32>
    %c1_3 = arith.constant 1 : index
    %c0_4 = arith.constant 0 : index
    %158 = arith.index_cast %154 : i32 to index
    %159 = vector.load %arg2[%c1_3, %c0_4, %158] : memref<2x8x256xf32, #tpu.memory_space<vmem>>, vector<1x8x256xf32>
    %160 = vector.shape_cast %159 : vector<1x8x256xf32> to vector<8x256xf32>
    %161 = vector.broadcast %0 : f32 to vector<8x256xf32>
    %162 = arith.mulf %161, %157 : vector<8x256xf32>
    %163 = vector.broadcast %1 : f32 to vector<8x256xf32>
    %164 = arith.mulf %163, %160 : vector<8x256xf32>
    %165 = arith.addf %162, %164 : vector<8x256xf32>
    %166 = vector.broadcast %20 : f32 to vector<8x256xf32>
    %167 = arith.addf %165, %166 : vector<8x256xf32>
    %cst = arith.constant 0.000000e+00 : f32
    %168 = vector.broadcast %cst : f32 to vector<8x256xf32>
    %169 = arith.maximumf %167, %168 : vector<8x256xf32>
    %170 = vector.broadcast %2 : f32 to vector<8x256xf32>
    %171 = arith.mulf %170, %157 : vector<8x256xf32>
    %172 = vector.broadcast %3 : f32 to vector<8x256xf32>
    %173 = arith.mulf %172, %160 : vector<8x256xf32>
    %174 = arith.addf %171, %173 : vector<8x256xf32>
    %175 = vector.broadcast %21 : f32 to vector<8x256xf32>
    %176 = arith.addf %174, %175 : vector<8x256xf32>
    %cst_5 = arith.constant 0.000000e+00 : f32
    %177 = vector.broadcast %cst_5 : f32 to vector<8x256xf32>
    %178 = arith.maximumf %176, %177 : vector<8x256xf32>
    %179 = vector.broadcast %4 : f32 to vector<8x256xf32>
    %180 = arith.mulf %179, %157 : vector<8x256xf32>
    %181 = vector.broadcast %5 : f32 to vector<8x256xf32>
    %182 = arith.mulf %181, %160 : vector<8x256xf32>
    %183 = arith.addf %180, %182 : vector<8x256xf32>
    %184 = vector.broadcast %22 : f32 to vector<8x256xf32>
    %185 = arith.addf %183, %184 : vector<8x256xf32>
    %cst_6 = arith.constant 0.000000e+00 : f32
    %186 = vector.broadcast %cst_6 : f32 to vector<8x256xf32>
    %187 = arith.maximumf %185, %186 : vector<8x256xf32>
    %188 = vector.broadcast %6 : f32 to vector<8x256xf32>
    %189 = arith.mulf %188, %157 : vector<8x256xf32>
    %190 = vector.broadcast %7 : f32 to vector<8x256xf32>
    %191 = arith.mulf %190, %160 : vector<8x256xf32>
    %192 = arith.addf %189, %191 : vector<8x256xf32>
    %193 = vector.broadcast %23 : f32 to vector<8x256xf32>
    %194 = arith.addf %192, %193 : vector<8x256xf32>
    %cst_7 = arith.constant 0.000000e+00 : f32
    %195 = vector.broadcast %cst_7 : f32 to vector<8x256xf32>
    %196 = arith.maximumf %194, %195 : vector<8x256xf32>
    %197 = vector.broadcast %8 : f32 to vector<8x256xf32>
    %198 = arith.mulf %197, %157 : vector<8x256xf32>
    %199 = vector.broadcast %9 : f32 to vector<8x256xf32>
    %200 = arith.mulf %199, %160 : vector<8x256xf32>
    %201 = arith.addf %198, %200 : vector<8x256xf32>
    %202 = vector.broadcast %24 : f32 to vector<8x256xf32>
    %203 = arith.addf %201, %202 : vector<8x256xf32>
    %cst_8 = arith.constant 0.000000e+00 : f32
    %204 = vector.broadcast %cst_8 : f32 to vector<8x256xf32>
    %205 = arith.maximumf %203, %204 : vector<8x256xf32>
    %206 = vector.broadcast %10 : f32 to vector<8x256xf32>
    %207 = arith.mulf %206, %157 : vector<8x256xf32>
    %208 = vector.broadcast %11 : f32 to vector<8x256xf32>
    %209 = arith.mulf %208, %160 : vector<8x256xf32>
    %210 = arith.addf %207, %209 : vector<8x256xf32>
    %211 = vector.broadcast %25 : f32 to vector<8x256xf32>
    %212 = arith.addf %210, %211 : vector<8x256xf32>
    %cst_9 = arith.constant 0.000000e+00 : f32
    %213 = vector.broadcast %cst_9 : f32 to vector<8x256xf32>
    %214 = arith.maximumf %212, %213 : vector<8x256xf32>
    %215 = vector.broadcast %12 : f32 to vector<8x256xf32>
    %216 = arith.mulf %215, %157 : vector<8x256xf32>
    %217 = vector.broadcast %13 : f32 to vector<8x256xf32>
    %218 = arith.mulf %217, %160 : vector<8x256xf32>
    %219 = arith.addf %216, %218 : vector<8x256xf32>
    %220 = vector.broadcast %26 : f32 to vector<8x256xf32>
    %221 = arith.addf %219, %220 : vector<8x256xf32>
    %cst_10 = arith.constant 0.000000e+00 : f32
    %222 = vector.broadcast %cst_10 : f32 to vector<8x256xf32>
    %223 = arith.maximumf %221, %222 : vector<8x256xf32>
    %224 = vector.broadcast %14 : f32 to vector<8x256xf32>
    %225 = arith.mulf %224, %157 : vector<8x256xf32>
    %226 = vector.broadcast %15 : f32 to vector<8x256xf32>
    %227 = arith.mulf %226, %160 : vector<8x256xf32>
    %228 = arith.addf %225, %227 : vector<8x256xf32>
    %229 = vector.broadcast %27 : f32 to vector<8x256xf32>
    %230 = arith.addf %228, %229 : vector<8x256xf32>
    %cst_11 = arith.constant 0.000000e+00 : f32
    %231 = vector.broadcast %cst_11 : f32 to vector<8x256xf32>
    %232 = arith.maximumf %230, %231 : vector<8x256xf32>
    %233 = vector.broadcast %16 : f32 to vector<8x256xf32>
    %234 = arith.mulf %233, %157 : vector<8x256xf32>
    %235 = vector.broadcast %17 : f32 to vector<8x256xf32>
    %236 = arith.mulf %235, %160 : vector<8x256xf32>
    %237 = arith.addf %234, %236 : vector<8x256xf32>
    %238 = vector.broadcast %28 : f32 to vector<8x256xf32>
    %239 = arith.addf %237, %238 : vector<8x256xf32>
    %cst_12 = arith.constant 0.000000e+00 : f32
    %240 = vector.broadcast %cst_12 : f32 to vector<8x256xf32>
    %241 = arith.maximumf %239, %240 : vector<8x256xf32>
    %242 = vector.broadcast %18 : f32 to vector<8x256xf32>
    %243 = arith.mulf %242, %157 : vector<8x256xf32>
    %244 = vector.broadcast %19 : f32 to vector<8x256xf32>
    %245 = arith.mulf %244, %160 : vector<8x256xf32>
    %246 = arith.addf %243, %245 : vector<8x256xf32>
    %247 = vector.broadcast %29 : f32 to vector<8x256xf32>
    %248 = arith.addf %246, %247 : vector<8x256xf32>
    %cst_13 = arith.constant 0.000000e+00 : f32
    %249 = vector.broadcast %cst_13 : f32 to vector<8x256xf32>
    %250 = arith.maximumf %248, %249 : vector<8x256xf32>
    %251 = vector.broadcast %30 : f32 to vector<8x256xf32>
    %252 = arith.mulf %251, %169 : vector<8x256xf32>
    %253 = vector.broadcast %31 : f32 to vector<8x256xf32>
    %254 = arith.mulf %253, %178 : vector<8x256xf32>
    %255 = arith.addf %252, %254 : vector<8x256xf32>
    %256 = vector.broadcast %32 : f32 to vector<8x256xf32>
    %257 = arith.mulf %256, %187 : vector<8x256xf32>
    %258 = arith.addf %255, %257 : vector<8x256xf32>
    %259 = vector.broadcast %33 : f32 to vector<8x256xf32>
    %260 = arith.mulf %259, %196 : vector<8x256xf32>
    %261 = arith.addf %258, %260 : vector<8x256xf32>
    %262 = vector.broadcast %34 : f32 to vector<8x256xf32>
    %263 = arith.mulf %262, %205 : vector<8x256xf32>
    %264 = arith.addf %261, %263 : vector<8x256xf32>
    %265 = vector.broadcast %35 : f32 to vector<8x256xf32>
    %266 = arith.mulf %265, %214 : vector<8x256xf32>
    %267 = arith.addf %264, %266 : vector<8x256xf32>
    %268 = vector.broadcast %36 : f32 to vector<8x256xf32>
    %269 = arith.mulf %268, %223 : vector<8x256xf32>
    %270 = arith.addf %267, %269 : vector<8x256xf32>
    %271 = vector.broadcast %37 : f32 to vector<8x256xf32>
    %272 = arith.mulf %271, %232 : vector<8x256xf32>
    %273 = arith.addf %270, %272 : vector<8x256xf32>
    %274 = vector.broadcast %38 : f32 to vector<8x256xf32>
    %275 = arith.mulf %274, %241 : vector<8x256xf32>
    %276 = arith.addf %273, %275 : vector<8x256xf32>
    %277 = vector.broadcast %39 : f32 to vector<8x256xf32>
    %278 = arith.mulf %277, %250 : vector<8x256xf32>
    %279 = arith.addf %276, %278 : vector<8x256xf32>
    %280 = vector.broadcast %130 : f32 to vector<8x256xf32>
    %281 = arith.addf %279, %280 : vector<8x256xf32>
    %cst_14 = arith.constant 0.000000e+00 : f32
    %282 = vector.broadcast %cst_14 : f32 to vector<8x256xf32>
    %283 = arith.maximumf %281, %282 : vector<8x256xf32>
    %284 = vector.broadcast %140 : f32 to vector<8x256xf32>
    %285 = arith.mulf %284, %283 : vector<8x256xf32>
    %286 = vector.broadcast %40 : f32 to vector<8x256xf32>
    %287 = arith.mulf %286, %169 : vector<8x256xf32>
    %288 = vector.broadcast %41 : f32 to vector<8x256xf32>
    %289 = arith.mulf %288, %178 : vector<8x256xf32>
    %290 = arith.addf %287, %289 : vector<8x256xf32>
    %291 = vector.broadcast %42 : f32 to vector<8x256xf32>
    %292 = arith.mulf %291, %187 : vector<8x256xf32>
    %293 = arith.addf %290, %292 : vector<8x256xf32>
    %294 = vector.broadcast %43 : f32 to vector<8x256xf32>
    %295 = arith.mulf %294, %196 : vector<8x256xf32>
    %296 = arith.addf %293, %295 : vector<8x256xf32>
    %297 = vector.broadcast %44 : f32 to vector<8x256xf32>
    %298 = arith.mulf %297, %205 : vector<8x256xf32>
    %299 = arith.addf %296, %298 : vector<8x256xf32>
    %300 = vector.broadcast %45 : f32 to vector<8x256xf32>
    %301 = arith.mulf %300, %214 : vector<8x256xf32>
    %302 = arith.addf %299, %301 : vector<8x256xf32>
    %303 = vector.broadcast %46 : f32 to vector<8x256xf32>
    %304 = arith.mulf %303, %223 : vector<8x256xf32>
    %305 = arith.addf %302, %304 : vector<8x256xf32>
    %306 = vector.broadcast %47 : f32 to vector<8x256xf32>
    %307 = arith.mulf %306, %232 : vector<8x256xf32>
    %308 = arith.addf %305, %307 : vector<8x256xf32>
    %309 = vector.broadcast %48 : f32 to vector<8x256xf32>
    %310 = arith.mulf %309, %241 : vector<8x256xf32>
    %311 = arith.addf %308, %310 : vector<8x256xf32>
    %312 = vector.broadcast %49 : f32 to vector<8x256xf32>
    %313 = arith.mulf %312, %250 : vector<8x256xf32>
    %314 = arith.addf %311, %313 : vector<8x256xf32>
    %315 = vector.broadcast %131 : f32 to vector<8x256xf32>
    %316 = arith.addf %314, %315 : vector<8x256xf32>
    %cst_15 = arith.constant 0.000000e+00 : f32
    %317 = vector.broadcast %cst_15 : f32 to vector<8x256xf32>
    %318 = arith.maximumf %316, %317 : vector<8x256xf32>
    %319 = vector.broadcast %141 : f32 to vector<8x256xf32>
    %320 = arith.mulf %319, %318 : vector<8x256xf32>
    %321 = arith.addf %285, %320 : vector<8x256xf32>
    %322 = vector.broadcast %50 : f32 to vector<8x256xf32>
    %323 = arith.mulf %322, %169 : vector<8x256xf32>
    %324 = vector.broadcast %51 : f32 to vector<8x256xf32>
    %325 = arith.mulf %324, %178 : vector<8x256xf32>
    %326 = arith.addf %323, %325 : vector<8x256xf32>
    %327 = vector.broadcast %52 : f32 to vector<8x256xf32>
    %328 = arith.mulf %327, %187 : vector<8x256xf32>
    %329 = arith.addf %326, %328 : vector<8x256xf32>
    %330 = vector.broadcast %53 : f32 to vector<8x256xf32>
    %331 = arith.mulf %330, %196 : vector<8x256xf32>
    %332 = arith.addf %329, %331 : vector<8x256xf32>
    %333 = vector.broadcast %54 : f32 to vector<8x256xf32>
    %334 = arith.mulf %333, %205 : vector<8x256xf32>
    %335 = arith.addf %332, %334 : vector<8x256xf32>
    %336 = vector.broadcast %55 : f32 to vector<8x256xf32>
    %337 = arith.mulf %336, %214 : vector<8x256xf32>
    %338 = arith.addf %335, %337 : vector<8x256xf32>
    %339 = vector.broadcast %56 : f32 to vector<8x256xf32>
    %340 = arith.mulf %339, %223 : vector<8x256xf32>
    %341 = arith.addf %338, %340 : vector<8x256xf32>
    %342 = vector.broadcast %57 : f32 to vector<8x256xf32>
    %343 = arith.mulf %342, %232 : vector<8x256xf32>
    %344 = arith.addf %341, %343 : vector<8x256xf32>
    %345 = vector.broadcast %58 : f32 to vector<8x256xf32>
    %346 = arith.mulf %345, %241 : vector<8x256xf32>
    %347 = arith.addf %344, %346 : vector<8x256xf32>
    %348 = vector.broadcast %59 : f32 to vector<8x256xf32>
    %349 = arith.mulf %348, %250 : vector<8x256xf32>
    %350 = arith.addf %347, %349 : vector<8x256xf32>
    %351 = vector.broadcast %132 : f32 to vector<8x256xf32>
    %352 = arith.addf %350, %351 : vector<8x256xf32>
    %cst_16 = arith.constant 0.000000e+00 : f32
    %353 = vector.broadcast %cst_16 : f32 to vector<8x256xf32>
    %354 = arith.maximumf %352, %353 : vector<8x256xf32>
    %355 = vector.broadcast %142 : f32 to vector<8x256xf32>
    %356 = arith.mulf %355, %354 : vector<8x256xf32>
    %357 = arith.addf %321, %356 : vector<8x256xf32>
    %358 = vector.broadcast %60 : f32 to vector<8x256xf32>
    %359 = arith.mulf %358, %169 : vector<8x256xf32>
    %360 = vector.broadcast %61 : f32 to vector<8x256xf32>
    %361 = arith.mulf %360, %178 : vector<8x256xf32>
    %362 = arith.addf %359, %361 : vector<8x256xf32>
    %363 = vector.broadcast %62 : f32 to vector<8x256xf32>
    %364 = arith.mulf %363, %187 : vector<8x256xf32>
    %365 = arith.addf %362, %364 : vector<8x256xf32>
    %366 = vector.broadcast %63 : f32 to vector<8x256xf32>
    %367 = arith.mulf %366, %196 : vector<8x256xf32>
    %368 = arith.addf %365, %367 : vector<8x256xf32>
    %369 = vector.broadcast %64 : f32 to vector<8x256xf32>
    %370 = arith.mulf %369, %205 : vector<8x256xf32>
    %371 = arith.addf %368, %370 : vector<8x256xf32>
    %372 = vector.broadcast %65 : f32 to vector<8x256xf32>
    %373 = arith.mulf %372, %214 : vector<8x256xf32>
    %374 = arith.addf %371, %373 : vector<8x256xf32>
    %375 = vector.broadcast %66 : f32 to vector<8x256xf32>
    %376 = arith.mulf %375, %223 : vector<8x256xf32>
    %377 = arith.addf %374, %376 : vector<8x256xf32>
    %378 = vector.broadcast %67 : f32 to vector<8x256xf32>
    %379 = arith.mulf %378, %232 : vector<8x256xf32>
    %380 = arith.addf %377, %379 : vector<8x256xf32>
    %381 = vector.broadcast %68 : f32 to vector<8x256xf32>
    %382 = arith.mulf %381, %241 : vector<8x256xf32>
    %383 = arith.addf %380, %382 : vector<8x256xf32>
    %384 = vector.broadcast %69 : f32 to vector<8x256xf32>
    %385 = arith.mulf %384, %250 : vector<8x256xf32>
    %386 = arith.addf %383, %385 : vector<8x256xf32>
    %387 = vector.broadcast %133 : f32 to vector<8x256xf32>
    %388 = arith.addf %386, %387 : vector<8x256xf32>
    %cst_17 = arith.constant 0.000000e+00 : f32
    %389 = vector.broadcast %cst_17 : f32 to vector<8x256xf32>
    %390 = arith.maximumf %388, %389 : vector<8x256xf32>
    %391 = vector.broadcast %143 : f32 to vector<8x256xf32>
    %392 = arith.mulf %391, %390 : vector<8x256xf32>
    %393 = arith.addf %357, %392 : vector<8x256xf32>
    %394 = vector.broadcast %70 : f32 to vector<8x256xf32>
    %395 = arith.mulf %394, %169 : vector<8x256xf32>
    %396 = vector.broadcast %71 : f32 to vector<8x256xf32>
    %397 = arith.mulf %396, %178 : vector<8x256xf32>
    %398 = arith.addf %395, %397 : vector<8x256xf32>
    %399 = vector.broadcast %72 : f32 to vector<8x256xf32>
    %400 = arith.mulf %399, %187 : vector<8x256xf32>
    %401 = arith.addf %398, %400 : vector<8x256xf32>
    %402 = vector.broadcast %73 : f32 to vector<8x256xf32>
    %403 = arith.mulf %402, %196 : vector<8x256xf32>
    %404 = arith.addf %401, %403 : vector<8x256xf32>
    %405 = vector.broadcast %74 : f32 to vector<8x256xf32>
    %406 = arith.mulf %405, %205 : vector<8x256xf32>
    %407 = arith.addf %404, %406 : vector<8x256xf32>
    %408 = vector.broadcast %75 : f32 to vector<8x256xf32>
    %409 = arith.mulf %408, %214 : vector<8x256xf32>
    %410 = arith.addf %407, %409 : vector<8x256xf32>
    %411 = vector.broadcast %76 : f32 to vector<8x256xf32>
    %412 = arith.mulf %411, %223 : vector<8x256xf32>
    %413 = arith.addf %410, %412 : vector<8x256xf32>
    %414 = vector.broadcast %77 : f32 to vector<8x256xf32>
    %415 = arith.mulf %414, %232 : vector<8x256xf32>
    %416 = arith.addf %413, %415 : vector<8x256xf32>
    %417 = vector.broadcast %78 : f32 to vector<8x256xf32>
    %418 = arith.mulf %417, %241 : vector<8x256xf32>
    %419 = arith.addf %416, %418 : vector<8x256xf32>
    %420 = vector.broadcast %79 : f32 to vector<8x256xf32>
    %421 = arith.mulf %420, %250 : vector<8x256xf32>
    %422 = arith.addf %419, %421 : vector<8x256xf32>
    %423 = vector.broadcast %134 : f32 to vector<8x256xf32>
    %424 = arith.addf %422, %423 : vector<8x256xf32>
    %cst_18 = arith.constant 0.000000e+00 : f32
    %425 = vector.broadcast %cst_18 : f32 to vector<8x256xf32>
    %426 = arith.maximumf %424, %425 : vector<8x256xf32>
    %427 = vector.broadcast %144 : f32 to vector<8x256xf32>
    %428 = arith.mulf %427, %426 : vector<8x256xf32>
    %429 = arith.addf %393, %428 : vector<8x256xf32>
    %430 = vector.broadcast %80 : f32 to vector<8x256xf32>
    %431 = arith.mulf %430, %169 : vector<8x256xf32>
    %432 = vector.broadcast %81 : f32 to vector<8x256xf32>
    %433 = arith.mulf %432, %178 : vector<8x256xf32>
    %434 = arith.addf %431, %433 : vector<8x256xf32>
    %435 = vector.broadcast %82 : f32 to vector<8x256xf32>
    %436 = arith.mulf %435, %187 : vector<8x256xf32>
    %437 = arith.addf %434, %436 : vector<8x256xf32>
    %438 = vector.broadcast %83 : f32 to vector<8x256xf32>
    %439 = arith.mulf %438, %196 : vector<8x256xf32>
    %440 = arith.addf %437, %439 : vector<8x256xf32>
    %441 = vector.broadcast %84 : f32 to vector<8x256xf32>
    %442 = arith.mulf %441, %205 : vector<8x256xf32>
    %443 = arith.addf %440, %442 : vector<8x256xf32>
    %444 = vector.broadcast %85 : f32 to vector<8x256xf32>
    %445 = arith.mulf %444, %214 : vector<8x256xf32>
    %446 = arith.addf %443, %445 : vector<8x256xf32>
    %447 = vector.broadcast %86 : f32 to vector<8x256xf32>
    %448 = arith.mulf %447, %223 : vector<8x256xf32>
    %449 = arith.addf %446, %448 : vector<8x256xf32>
    %450 = vector.broadcast %87 : f32 to vector<8x256xf32>
    %451 = arith.mulf %450, %232 : vector<8x256xf32>
    %452 = arith.addf %449, %451 : vector<8x256xf32>
    %453 = vector.broadcast %88 : f32 to vector<8x256xf32>
    %454 = arith.mulf %453, %241 : vector<8x256xf32>
    %455 = arith.addf %452, %454 : vector<8x256xf32>
    %456 = vector.broadcast %89 : f32 to vector<8x256xf32>
    %457 = arith.mulf %456, %250 : vector<8x256xf32>
    %458 = arith.addf %455, %457 : vector<8x256xf32>
    %459 = vector.broadcast %135 : f32 to vector<8x256xf32>
    %460 = arith.addf %458, %459 : vector<8x256xf32>
    %cst_19 = arith.constant 0.000000e+00 : f32
    %461 = vector.broadcast %cst_19 : f32 to vector<8x256xf32>
    %462 = arith.maximumf %460, %461 : vector<8x256xf32>
    %463 = vector.broadcast %145 : f32 to vector<8x256xf32>
    %464 = arith.mulf %463, %462 : vector<8x256xf32>
    %465 = arith.addf %429, %464 : vector<8x256xf32>
    %466 = vector.broadcast %90 : f32 to vector<8x256xf32>
    %467 = arith.mulf %466, %169 : vector<8x256xf32>
    %468 = vector.broadcast %91 : f32 to vector<8x256xf32>
    %469 = arith.mulf %468, %178 : vector<8x256xf32>
    %470 = arith.addf %467, %469 : vector<8x256xf32>
    %471 = vector.broadcast %92 : f32 to vector<8x256xf32>
    %472 = arith.mulf %471, %187 : vector<8x256xf32>
    %473 = arith.addf %470, %472 : vector<8x256xf32>
    %474 = vector.broadcast %93 : f32 to vector<8x256xf32>
    %475 = arith.mulf %474, %196 : vector<8x256xf32>
    %476 = arith.addf %473, %475 : vector<8x256xf32>
    %477 = vector.broadcast %94 : f32 to vector<8x256xf32>
    %478 = arith.mulf %477, %205 : vector<8x256xf32>
    %479 = arith.addf %476, %478 : vector<8x256xf32>
    %480 = vector.broadcast %95 : f32 to vector<8x256xf32>
    %481 = arith.mulf %480, %214 : vector<8x256xf32>
    %482 = arith.addf %479, %481 : vector<8x256xf32>
    %483 = vector.broadcast %96 : f32 to vector<8x256xf32>
    %484 = arith.mulf %483, %223 : vector<8x256xf32>
    %485 = arith.addf %482, %484 : vector<8x256xf32>
    %486 = vector.broadcast %97 : f32 to vector<8x256xf32>
    %487 = arith.mulf %486, %232 : vector<8x256xf32>
    %488 = arith.addf %485, %487 : vector<8x256xf32>
    %489 = vector.broadcast %98 : f32 to vector<8x256xf32>
    %490 = arith.mulf %489, %241 : vector<8x256xf32>
    %491 = arith.addf %488, %490 : vector<8x256xf32>
    %492 = vector.broadcast %99 : f32 to vector<8x256xf32>
    %493 = arith.mulf %492, %250 : vector<8x256xf32>
    %494 = arith.addf %491, %493 : vector<8x256xf32>
    %495 = vector.broadcast %136 : f32 to vector<8x256xf32>
    %496 = arith.addf %494, %495 : vector<8x256xf32>
    %cst_20 = arith.constant 0.000000e+00 : f32
    %497 = vector.broadcast %cst_20 : f32 to vector<8x256xf32>
    %498 = arith.maximumf %496, %497 : vector<8x256xf32>
    %499 = vector.broadcast %146 : f32 to vector<8x256xf32>
    %500 = arith.mulf %499, %498 : vector<8x256xf32>
    %501 = arith.addf %465, %500 : vector<8x256xf32>
    %502 = vector.broadcast %100 : f32 to vector<8x256xf32>
    %503 = arith.mulf %502, %169 : vector<8x256xf32>
    %504 = vector.broadcast %101 : f32 to vector<8x256xf32>
    %505 = arith.mulf %504, %178 : vector<8x256xf32>
    %506 = arith.addf %503, %505 : vector<8x256xf32>
    %507 = vector.broadcast %102 : f32 to vector<8x256xf32>
    %508 = arith.mulf %507, %187 : vector<8x256xf32>
    %509 = arith.addf %506, %508 : vector<8x256xf32>
    %510 = vector.broadcast %103 : f32 to vector<8x256xf32>
    %511 = arith.mulf %510, %196 : vector<8x256xf32>
    %512 = arith.addf %509, %511 : vector<8x256xf32>
    %513 = vector.broadcast %104 : f32 to vector<8x256xf32>
    %514 = arith.mulf %513, %205 : vector<8x256xf32>
    %515 = arith.addf %512, %514 : vector<8x256xf32>
    %516 = vector.broadcast %105 : f32 to vector<8x256xf32>
    %517 = arith.mulf %516, %214 : vector<8x256xf32>
    %518 = arith.addf %515, %517 : vector<8x256xf32>
    %519 = vector.broadcast %106 : f32 to vector<8x256xf32>
    %520 = arith.mulf %519, %223 : vector<8x256xf32>
    %521 = arith.addf %518, %520 : vector<8x256xf32>
    %522 = vector.broadcast %107 : f32 to vector<8x256xf32>
    %523 = arith.mulf %522, %232 : vector<8x256xf32>
    %524 = arith.addf %521, %523 : vector<8x256xf32>
    %525 = vector.broadcast %108 : f32 to vector<8x256xf32>
    %526 = arith.mulf %525, %241 : vector<8x256xf32>
    %527 = arith.addf %524, %526 : vector<8x256xf32>
    %528 = vector.broadcast %109 : f32 to vector<8x256xf32>
    %529 = arith.mulf %528, %250 : vector<8x256xf32>
    %530 = arith.addf %527, %529 : vector<8x256xf32>
    %531 = vector.broadcast %137 : f32 to vector<8x256xf32>
    %532 = arith.addf %530, %531 : vector<8x256xf32>
    %cst_21 = arith.constant 0.000000e+00 : f32
    %533 = vector.broadcast %cst_21 : f32 to vector<8x256xf32>
    %534 = arith.maximumf %532, %533 : vector<8x256xf32>
    %535 = vector.broadcast %147 : f32 to vector<8x256xf32>
    %536 = arith.mulf %535, %534 : vector<8x256xf32>
    %537 = arith.addf %501, %536 : vector<8x256xf32>
    %538 = vector.broadcast %110 : f32 to vector<8x256xf32>
    %539 = arith.mulf %538, %169 : vector<8x256xf32>
    %540 = vector.broadcast %111 : f32 to vector<8x256xf32>
    %541 = arith.mulf %540, %178 : vector<8x256xf32>
    %542 = arith.addf %539, %541 : vector<8x256xf32>
    %543 = vector.broadcast %112 : f32 to vector<8x256xf32>
    %544 = arith.mulf %543, %187 : vector<8x256xf32>
    %545 = arith.addf %542, %544 : vector<8x256xf32>
    %546 = vector.broadcast %113 : f32 to vector<8x256xf32>
    %547 = arith.mulf %546, %196 : vector<8x256xf32>
    %548 = arith.addf %545, %547 : vector<8x256xf32>
    %549 = vector.broadcast %114 : f32 to vector<8x256xf32>
    %550 = arith.mulf %549, %205 : vector<8x256xf32>
    %551 = arith.addf %548, %550 : vector<8x256xf32>
    %552 = vector.broadcast %115 : f32 to vector<8x256xf32>
    %553 = arith.mulf %552, %214 : vector<8x256xf32>
    %554 = arith.addf %551, %553 : vector<8x256xf32>
    %555 = vector.broadcast %116 : f32 to vector<8x256xf32>
    %556 = arith.mulf %555, %223 : vector<8x256xf32>
    %557 = arith.addf %554, %556 : vector<8x256xf32>
    %558 = vector.broadcast %117 : f32 to vector<8x256xf32>
    %559 = arith.mulf %558, %232 : vector<8x256xf32>
    %560 = arith.addf %557, %559 : vector<8x256xf32>
    %561 = vector.broadcast %118 : f32 to vector<8x256xf32>
    %562 = arith.mulf %561, %241 : vector<8x256xf32>
    %563 = arith.addf %560, %562 : vector<8x256xf32>
    %564 = vector.broadcast %119 : f32 to vector<8x256xf32>
    %565 = arith.mulf %564, %250 : vector<8x256xf32>
    %566 = arith.addf %563, %565 : vector<8x256xf32>
    %567 = vector.broadcast %138 : f32 to vector<8x256xf32>
    %568 = arith.addf %566, %567 : vector<8x256xf32>
    %cst_22 = arith.constant 0.000000e+00 : f32
    %569 = vector.broadcast %cst_22 : f32 to vector<8x256xf32>
    %570 = arith.maximumf %568, %569 : vector<8x256xf32>
    %571 = vector.broadcast %148 : f32 to vector<8x256xf32>
    %572 = arith.mulf %571, %570 : vector<8x256xf32>
    %573 = arith.addf %537, %572 : vector<8x256xf32>
    %574 = vector.broadcast %120 : f32 to vector<8x256xf32>
    %575 = arith.mulf %574, %169 : vector<8x256xf32>
    %576 = vector.broadcast %121 : f32 to vector<8x256xf32>
    %577 = arith.mulf %576, %178 : vector<8x256xf32>
    %578 = arith.addf %575, %577 : vector<8x256xf32>
    %579 = vector.broadcast %122 : f32 to vector<8x256xf32>
    %580 = arith.mulf %579, %187 : vector<8x256xf32>
    %581 = arith.addf %578, %580 : vector<8x256xf32>
    %582 = vector.broadcast %123 : f32 to vector<8x256xf32>
    %583 = arith.mulf %582, %196 : vector<8x256xf32>
    %584 = arith.addf %581, %583 : vector<8x256xf32>
    %585 = vector.broadcast %124 : f32 to vector<8x256xf32>
    %586 = arith.mulf %585, %205 : vector<8x256xf32>
    %587 = arith.addf %584, %586 : vector<8x256xf32>
    %588 = vector.broadcast %125 : f32 to vector<8x256xf32>
    %589 = arith.mulf %588, %214 : vector<8x256xf32>
    %590 = arith.addf %587, %589 : vector<8x256xf32>
    %591 = vector.broadcast %126 : f32 to vector<8x256xf32>
    %592 = arith.mulf %591, %223 : vector<8x256xf32>
    %593 = arith.addf %590, %592 : vector<8x256xf32>
    %594 = vector.broadcast %127 : f32 to vector<8x256xf32>
    %595 = arith.mulf %594, %232 : vector<8x256xf32>
    %596 = arith.addf %593, %595 : vector<8x256xf32>
    %597 = vector.broadcast %128 : f32 to vector<8x256xf32>
    %598 = arith.mulf %597, %241 : vector<8x256xf32>
    %599 = arith.addf %596, %598 : vector<8x256xf32>
    %600 = vector.broadcast %129 : f32 to vector<8x256xf32>
    %601 = arith.mulf %600, %250 : vector<8x256xf32>
    %602 = arith.addf %599, %601 : vector<8x256xf32>
    %603 = vector.broadcast %139 : f32 to vector<8x256xf32>
    %604 = arith.addf %602, %603 : vector<8x256xf32>
    %cst_23 = arith.constant 0.000000e+00 : f32
    %605 = vector.broadcast %cst_23 : f32 to vector<8x256xf32>
    %606 = arith.maximumf %604, %605 : vector<8x256xf32>
    %607 = vector.broadcast %149 : f32 to vector<8x256xf32>
    %608 = arith.mulf %607, %606 : vector<8x256xf32>
    %609 = arith.addf %573, %608 : vector<8x256xf32>
    %610 = vector.broadcast %150 : f32 to vector<8x256xf32>
    %611 = arith.addf %609, %610 : vector<8x256xf32>
    %c0_24 = arith.constant 0 : index
    %612 = arith.index_cast %154 : i32 to index
    %613 = vector.load %arg3[%c0_24, %612] : memref<8x256xf32, #tpu.memory_space<vmem>>, vector<8x256xf32>
    tpu.vector_store %arg3[%c0_24, %612], %611 {strides = array<i32>} : memref<8x256xf32, #tpu.memory_space<vmem>>, vector<8x256xf32>,
    %c1_i32_25 = arith.constant 1 : i32
    return
  }
  func.func @transform_0(%arg0: i32) -> i32 {
    %c0_i32 = arith.constant 0 : i32
    %c0_i32_0 = arith.constant 0 : i32
    return %c0_i32 : i32
  }
  func.func @transform_1(%arg0: i32) -> (i32, i32, i32) {
    %c0_i32 = arith.constant 0 : i32
    %c0_i32_0 = arith.constant 0 : i32
    %c0_i32_1 = arith.constant 0 : i32
    return %c0_i32, %arg0, %c0_i32_0 : i32, i32, i32
  }
  func.func @transform_2(%arg0: i32) -> (i32, i32) {
    %c0_i32 = arith.constant 0 : i32
    %c0_i32_0 = arith.constant 0 : i32
    return %arg0, %c0_i32 : i32, i32
  }
}

</mosaic_0001>

<llo_original>
// kernel: tpu_custom_call.1
$region0: #{tpu_custom_call.1}
  #allocation0 [shape = 'u32[]', space=smem, size = 0x4, offset = 0x4, fixed_abs, tag = 'smem constant byte address 0x4 - core index']
  #allocation1 [shape = 'u32[144,128]{1,0:T(1,128)}', space=vmem, size = 0x12000, scoped, tag = 'internal scratch']
  %s0 = inlined_call_operand.hbm [shape: f32[151], index: 0, kind: input, shape index: {}]
  %s1 = inlined_call_operand.hbm [shape: f32[2,8,256], index: 1, kind: input, shape index: {}]
  %s2 = inlined_call_operand.hbm [shape: f32[8,256], index: 2, kind: output, shape index: {}]
  %s3 = sld [smem:[#allocation0]]
  $region26: #{tpu_custom_call.1} parent=0
    _
  %s5 = ssub.s32 1, %s3
  %s6 = scalar_select 0, %s5, %s3
  $region1: #{tpu_custom_call.1} parent=0
    #allocation2 [shape = 'u8[1024]{0}', space=smem, size = 0x400, scoped, tag = 'input window, operand 0, single buffered']
    #allocation3 [shape = 's32[1]{0}', space=sflag, size = 0x4, scoped, tag = 'scoped memory for tpu_custom_call.1']
    #allocation4 [shape = 's32[1]{0}', space=sflag, size = 0x4, scoped, tag = 'scoped memory for tpu_custom_call.1']
    #allocation5 [shape = 's32[1]{0}', space=sflag, size = 0x4, scoped, tag = 'scoped memory for tpu_custom_call.1']
    #allocation6 [shape = 'u8[16384]{0}', space=vmem, size = 0x4000, scoped, tag = 'input window, operand 1, single buffered']
    #allocation7 [shape = 'u8[8192]{0}', space=vmem, size = 0x2000, scoped, tag = 'output window, operand 0, single buffered']
    %7 = vsyncpa [#allocation5], 0
    %8 = vsyncpa [#allocation3], 0
    %9 = vsyncpa [#allocation4], 0
    // Predicated region
    $region2: #{tpu_custom_call.1} parent=1 // pred_check
      _
    $region3: #{tpu_custom_call.1} parent=1 // pred_check_branch
      %11 = sbr.rel (0) target = $region5
    $region4: #{tpu_custom_call.1} parent=1 // pred_region
      %s13 = ssub.s32 32, 32
      %14 = vsyncadd [#allocation5], %s13
      %17 = dma.hbm_to_smem %s0, 32, [#allocation2], [#allocation5]
    $region5: #{tpu_custom_call.1} parent=1 // pred_fallthru
      _
    // Predicated region
    $region6: #{tpu_custom_call.1} parent=1 // pred_check
      _
    $region7: #{tpu_custom_call.1} parent=1 // pred_check_branch
      %19 = sbr.rel (0) target = $region9
    $region8: #{tpu_custom_call.1} parent=1 // pred_region
      %s21 = ssub.s32 512, 512
      %22 = vsyncadd [#allocation3], %s21
      %s23 = sshll.u32 [#allocation6], 4
      %s24 = int_to_ptr.vmem [resolvable:$true] %s23
      %29 = dma.hbm_to_vmem [thread:$0]  %s1, 512, %s24, [#allocation3], 256, 256, 16
    $region9: #{tpu_custom_call.1} parent=1 // pred_fallthru
      _
    // Predicated region
    $region10: #{tpu_custom_call.1} parent=1 // pred_check
      _
    $region11: #{tpu_custom_call.1} parent=1 // pred_check_branch
      %31 = sbr.rel (0) target = $region13
    $region12: #{tpu_custom_call.1} parent=1 // pred_region
      %32 = dma.done [#allocation5], 32
    $region13: #{tpu_custom_call.1} parent=1 // pred_fallthru
      _
    // Predicated region
    $region14: #{tpu_custom_call.1} parent=1 // pred_check
      _
    $region15: #{tpu_custom_call.1} parent=1 // pred_check_branch
      %34 = sbr.rel (0) target = $region17
    $region16: #{tpu_custom_call.1} parent=1 // pred_region
      %35 = dma.done [#allocation3], 512
    $region17: #{tpu_custom_call.1} parent=1 // pred_fallthru
      _
    %36 = sfence
    %s37 = sld [smem:[#allocation2]]
    %s38 = sld [smem:[#allocation2 + $0x1]]
    %s39 = sld [smem:[#allocation2 + $0x2]]
    %s40 = sld [smem:[#allocation2 + $0x3]]
    %s41 = sld [smem:[#allocation2 + $0x4]]
    %s42 = sld [smem:[#allocation2 + $0x5]]
    %s43 = sld [smem:[#allocation2 + $0x6]]
    %s44 = sld [smem:[#allocation2 + $0x7]]
    %s45 = sld [smem:[#allocation2 + $0x8]]
    %s46 = sld [smem:[#allocation2 + $0x9]]
    %s47 = sld [smem:[#allocation2 + $0xa]]
    %s48 = sld [smem:[#allocation2 + $0xb]]
    %s49 = sld [smem:[#allocation2 + $0xc]]
    %s50 = sld [smem:[#allocation2 + $0xd]]
    %s51 = sld [smem:[#allocation2 + $0xe]]
    %s52 = sld [smem:[#allocation2 + $0xf]]
    %s53 = sld [smem:[#allocation2 + $0x10]]
    %s54 = sld [smem:[#allocation2 + $0x11]]
    %s55 = sld [smem:[#allocation2 + $0x12]]
    %s56 = sld [smem:[#allocation2 + $0x13]]
    %s57 = sld [smem:[#allocation2 + $0x14]]
    %s58 = sld [smem:[#allocation2 + $0x15]]
    %s59 = sld [smem:[#allocation2 + $0x16]]
    %s60 = sld [smem:[#allocation2 + $0x17]]
    %s61 = sld [smem:[#allocation2 + $0x18]]
    %s62 = sld [smem:[#allocation2 + $0x19]]
    %s63 = sld [smem:[#allocation2 + $0x1a]]
    %s64 = sld [smem:[#allocation2 + $0x1b]]
    %s65 = sld [smem:[#allocation2 + $0x1c]]
    %s66 = sld [smem:[#allocation2 + $0x1d]]
    %s67 = sld [smem:[#allocation2 + $0x1e]]
    %s68 = sld [smem:[#allocation2 + $0x1f]]
    %s69 = sld [smem:[#allocation2 + $0x20]]
    %s70 = sld [smem:[#allocation2 + $0x21]]
    %s71 = sld [smem:[#allocation2 + $0x22]]
    %s72 = sld [smem:[#allocation2 + $0x23]]
    %s73 = sld [smem:[#allocation2 + $0x24]]
    %s74 = sld [smem:[#allocation2 + $0x25]]
    %s75 = sld [smem:[#allocation2 + $0x26]]
    %s76 = sld [smem:[#allocation2 + $0x27]]
    %s77 = sld [smem:[#allocation2 + $0x28]]
    %s78 = sld [smem:[#allocation2 + $0x29]]
    %s79 = sld [smem:[#allocation2 + $0x2a]]
    %s80 = sld [smem:[#allocation2 + $0x2b]]
    %s81 = sld [smem:[#allocation2 + $0x2c]]
    %s82 = sld [smem:[#allocation2 + $0x2d]]
    %s83 = sld [smem:[#allocation2 + $0x2e]]
    %s84 = sld [smem:[#allocation2 + $0x2f]]
    %s85 = sld [smem:[#allocation2 + $0x30]]
    %s86 = sld [smem:[#allocation2 + $0x31]]
    %s87 = sld [smem:[#allocation2 + $0x32]]
    %s88 = sld [smem:[#allocation2 + $0x33]]
    %s89 = sld [smem:[#allocation2 + $0x34]]
    %s90 = sld [smem:[#allocation2 + $0x35]]
    %s91 = sld [smem:[#allocation2 + $0x36]]
    %s92 = sld [smem:[#allocation2 + $0x37]]
    %s93 = sld [smem:[#allocation2 + $0x38]]
    %s94 = sld [smem:[#allocation2 + $0x39]]
    %s95 = sld [smem:[#allocation2 + $0x3a]]
    %s96 = sld [smem:[#allocation2 + $0x3b]]
    %s97 = sld [smem:[#allocation2 + $0x3c]]
    %s98 = sld [smem:[#allocation2 + $0x3d]]
    %s99 = sld [smem:[#allocation2 + $0x3e]]
    %s100 = sld [smem:[#allocation2 + $0x3f]]
    %s101 = sld [smem:[#allocation2 + $0x40]]
    %s102 = sld [smem:[#allocation2 + $0x41]]
    %s103 = sld [smem:[#allocation2 + $0x42]]
    %s104 = sld [smem:[#allocation2 + $0x43]]
    %s105 = sld [smem:[#allocation2 + $0x44]]
    %s106 = sld [smem:[#allocation2 + $0x45]]
    %s107 = sld [smem:[#allocation2 + $0x46]]
    %s108 = sld [smem:[#allocation2 + $0x47]]
    %s109 = sld [smem:[#allocation2 + $0x48]]
    %s110 = sld [smem:[#allocation2 + $0x49]]
    %s111 = sld [smem:[#allocation2 + $0x4a]]
    %s112 = sld [smem:[#allocation2 + $0x4b]]
    %s113 = sld [smem:[#allocation2 + $0x4c]]
    %s114 = sld [smem:[#allocation2 + $0x4d]]
    %s115 = sld [smem:[#allocation2 + $0x4e]]
    %s116 = sld [smem:[#allocation2 + $0x4f]]
    %s117 = sld [smem:[#allocation2 + $0x50]]
    %s118 = sld [smem:[#allocation2 + $0x51]]
    %s119 = sld [smem:[#allocation2 + $0x52]]
    %s120 = sld [smem:[#allocation2 + $0x53]]
    %s121 = sld [smem:[#allocation2 + $0x54]]
    %s122 = sld [smem:[#allocation2 + $0x55]]
    %s123 = sld [smem:[#allocation2 + $0x56]]
    %s124 = sld [smem:[#allocation2 + $0x57]]
    %s125 = sld [smem:[#allocation2 + $0x58]]
    %s126 = sld [smem:[#allocation2 + $0x59]]
    %s127 = sld [smem:[#allocation2 + $0x5a]]
    %s128 = sld [smem:[#allocation2 + $0x5b]]
    %s129 = sld [smem:[#allocation2 + $0x5c]]
    %s130 = sld [smem:[#allocation2 + $0x5d]]
    %s131 = sld [smem:[#allocation2 + $0x5e]]
    %s132 = sld [smem:[#allocation2 + $0x5f]]
    %s133 = sld [smem:[#allocation2 + $0x60]]
    %s134 = sld [smem:[#allocation2 + $0x61]]
    %s135 = sld [smem:[#allocation2 + $0x62]]
    %s136 = sld [smem:[#allocation2 + $0x63]]
    %s137 = sld [smem:[#allocation2 + $0x64]]
    %s138 = sld [smem:[#allocation2 + $0x65]]
    %s139 = sld [smem:[#allocation2 + $0x66]]
    %s140 = sld [smem:[#allocation2 + $0x67]]
    %s141 = sld [smem:[#allocation2 + $0x68]]
    %s142 = sld [smem:[#allocation2 + $0x69]]
    %s143 = sld [smem:[#allocation2 + $0x6a]]
    %s144 = sld [smem:[#allocation2 + $0x6b]]
    %s145 = sld [smem:[#allocation2 + $0x6c]]
    %s146 = sld [smem:[#allocation2 + $0x6d]]
    %s147 = sld [smem:[#allocation2 + $0x6e]]
    %s148 = sld [smem:[#allocation2 + $0x6f]]
    %s149 = sld [smem:[#allocation2 + $0x70]]
    %s150 = sld [smem:[#allocation2 + $0x71]]
    %s151 = sld [smem:[#allocation2 + $0x72]]
    %s152 = sld [smem:[#allocation2 + $0x73]]
    %s153 = sld [smem:[#allocation2 + $0x74]]
    %s154 = sld [smem:[#allocation2 + $0x75]]
    %s155 = sld [smem:[#allocation2 + $0x76]]
    %s156 = sld [smem:[#allocation2 + $0x77]]
    %s157 = sld [smem:[#allocation2 + $0x78]]
    %s158 = sld [smem:[#allocation2 + $0x79]]
    %s159 = sld [smem:[#allocation2 + $0x7a]]
    %s160 = sld [smem:[#allocation2 + $0x7b]]
    %s161 = sld [smem:[#allocation2 + $0x7c]]
    %s162 = sld [smem:[#allocation2 + $0x7d]]
    %s163 = sld [smem:[#allocation2 + $0x7e]]
    %s164 = sld [smem:[#allocation2 + $0x7f]]
    %s165 = sld [smem:[#allocation2 + $0x80]]
    %s166 = sld [smem:[#allocation2 + $0x81]]
    %s167 = sld [smem:[#allocation2 + $0x82]]
    %s168 = sld [smem:[#allocation2 + $0x83]]
    %s169 = sld [smem:[#allocation2 + $0x84]]
    %s170 = sld [smem:[#allocation2 + $0x85]]
    %s171 = sld [smem:[#allocation2 + $0x86]]
    %s172 = sld [smem:[#allocation2 + $0x87]]
    %s173 = sld [smem:[#allocation2 + $0x88]]
    %s174 = sld [smem:[#allocation2 + $0x89]]
    %s175 = sld [smem:[#allocation2 + $0x8a]]
    %s176 = sld [smem:[#allocation2 + $0x8b]]
    %s177 = sld [smem:[#allocation2 + $0x8c]]
    %s178 = sld [smem:[#allocation2 + $0x8d]]
    %s179 = sld [smem:[#allocation2 + $0x8e]]
    %s180 = sld [smem:[#allocation2 + $0x8f]]
    %s181 = sld [smem:[#allocation2 + $0x90]]
    %s182 = sld [smem:[#allocation2 + $0x91]]
    %s183 = sld [smem:[#allocation2 + $0x92]]
    %s184 = sld [smem:[#allocation2 + $0x93]]
    %s185 = sld [smem:[#allocation2 + $0x94]]
    %s186 = sld [smem:[#allocation2 + $0x95]]
    %s187 = sld [smem:[#allocation2 + $0x96]]
    %v188 = vld [vmem:[#allocation6] sm:$0xff]
    %v189 = vld [vmem:[#allocation6 + $0x8] sm:$0xff]
    %s190 = sadd.s32 0, 2
    %s191 = smul.addr %s190, 8
    %s192 = scalar_lea.vmem [#allocation6], %s191
    %v193 = vld [vmem:[%s192] sm:$0xff]
    %v194 = vld [vmem:[%s192 + $0x8] sm:$0xff]
    %v195 = vstv %s37
    %v196 = vmul.f32 %v195, %v188
    %v197 = vmul.f32 %v195, %v189
    %v198 = vstv %s38
    %v199 = vmul.f32 %v198, %v193
    %v200 = vmul.f32 %v198, %v194
    %v201 = vadd.f32 %v196, %v199
    %v202 = vadd.f32 %v197, %v200
    %v203 = vstv %s57
    %v204 = vadd.f32 %v201, %v203
    %v205 = vadd.f32 %v202, %v203
    %v206 = vmax.f32 %v204, 0.0
    %v207 = vmax.f32 %v205, 0.0
    %v208 = vstv %s39
    %v209 = vmul.f32 %v208, %v188
    %v210 = vmul.f32 %v208, %v189
    %v211 = vstv %s40
    %v212 = vmul.f32 %v211, %v193
    %v213 = vmul.f32 %v211, %v194
    %v214 = vadd.f32 %v209, %v212
    %v215 = vadd.f32 %v210, %v213
    %v216 = vstv %s58
    %v217 = vadd.f32 %v214, %v216
    %v218 = vadd.f32 %v215, %v216
    %v219 = vmax.f32 %v217, 0.0
    %v220 = vmax.f32 %v218, 0.0
    %v221 = vstv %s41
    %v222 = vmul.f32 %v221, %v188
    %v223 = vmul.f32 %v221, %v189
    %v224 = vstv %s42
    %v225 = vmul.f32 %v224, %v193
    %v226 = vmul.f32 %v224, %v194
    %v227 = vadd.f32 %v222, %v225
    %v228 = vadd.f32 %v223, %v226
    %v229 = vstv %s59
    %v230 = vadd.f32 %v227, %v229
    %v231 = vadd.f32 %v228, %v229
    %v232 = vmax.f32 %v230, 0.0
    %v233 = vmax.f32 %v231, 0.0
    %v234 = vstv %s43
    %v235 = vmul.f32 %v234, %v188
    %v236 = vmul.f32 %v234, %v189
    %v237 = vstv %s44
    %v238 = vmul.f32 %v237, %v193
    %v239 = vmul.f32 %v237, %v194
    %v240 = vadd.f32 %v235, %v238
    %v241 = vadd.f32 %v236, %v239
    %v242 = vstv %s60
    %v243 = vadd.f32 %v240, %v242
    %v244 = vadd.f32 %v241, %v242
    %v245 = vmax.f32 %v243, 0.0
    %v246 = vmax.f32 %v244, 0.0
    %v247 = vstv %s45
    %v248 = vmul.f32 %v247, %v188
    %v249 = vmul.f32 %v247, %v189
    %v250 = vstv %s46
    %v251 = vmul.f32 %v250, %v193
    %v252 = vmul.f32 %v250, %v194
    %v253 = vadd.f32 %v248, %v251
    %v254 = vadd.f32 %v249, %v252
    %v255 = vstv %s61
    %v256 = vadd.f32 %v253, %v255
    %v257 = vadd.f32 %v254, %v255
    %v258 = vmax.f32 %v256, 0.0
    %v259 = vmax.f32 %v257, 0.0
    %v260 = vstv %s47
    %v261 = vmul.f32 %v260, %v188
    %v262 = vmul.f32 %v260, %v189
    %v263 = vstv %s48
    %v264 = vmul.f32 %v263, %v193
    %v265 = vmul.f32 %v263, %v194
    %v266 = vadd.f32 %v261, %v264
    %v267 = vadd.f32 %v262, %v265
    %v268 = vstv %s62
    %v269 = vadd.f32 %v266, %v268
    %v270 = vadd.f32 %v267, %v268
    %v271 = vmax.f32 %v269, 0.0
    %v272 = vmax.f32 %v270, 0.0
    %v273 = vstv %s49
    %v274 = vmul.f32 %v273, %v188
    %v275 = vmul.f32 %v273, %v189
    %v276 = vstv %s50
    %v277 = vmul.f32 %v276, %v193
    %v278 = vmul.f32 %v276, %v194
    %v279 = vadd.f32 %v274, %v277
    %v280 = vadd.f32 %v275, %v278
    %v281 = vstv %s63
    %v282 = vadd.f32 %v279, %v281
    %v283 = vadd.f32 %v280, %v281
    %v284 = vmax.f32 %v282, 0.0
    %v285 = vmax.f32 %v283, 0.0
    %v286 = vstv %s51
    %v287 = vmul.f32 %v286, %v188
    %v288 = vmul.f32 %v286, %v189
    %v289 = vstv %s52
    %v290 = vmul.f32 %v289, %v193
    %v291 = vmul.f32 %v289, %v194
    %v292 = vadd.f32 %v287, %v290
    %v293 = vadd.f32 %v288, %v291
    %v294 = vstv %s64
    %v295 = vadd.f32 %v292, %v294
    %v296 = vadd.f32 %v293, %v294
    %v297 = vmax.f32 %v295, 0.0
    %v298 = vmax.f32 %v296, 0.0
    %v299 = vstv %s53
    %v300 = vmul.f32 %v299, %v188
    %v301 = vmul.f32 %v299, %v189
    %v302 = vstv %s54
    %v303 = vmul.f32 %v302, %v193
    %v304 = vmul.f32 %v302, %v194
    %v305 = vadd.f32 %v300, %v303
    %v306 = vadd.f32 %v301, %v304
    %v307 = vstv %s65
    %v308 = vadd.f32 %v305, %v307
    %v309 = vadd.f32 %v306, %v307
    %v310 = vmax.f32 %v308, 0.0
    %v311 = vmax.f32 %v309, 0.0
    %v312 = vstv %s55
    %v313 = vmul.f32 %v312, %v188
    %v314 = vmul.f32 %v312, %v189
    %v315 = vstv %s56
    %v316 = vmul.f32 %v315, %v193
    %v317 = vmul.f32 %v315, %v194
    %v318 = vadd.f32 %v313, %v316
    %v319 = vadd.f32 %v314, %v317
    %v320 = vstv %s66
    %v321 = vadd.f32 %v318, %v320
    %v322 = vadd.f32 %v319, %v320
    %v323 = vmax.f32 %v321, 0.0
    %v324 = vmax.f32 %v322, 0.0
    %v325 = vstv %s67
    %v326 = vmul.f32 %v325, %v206
    %v327 = vmul.f32 %v325, %v207
    %v328 = vstv %s68
    %v329 = vmul.f32 %v328, %v219
    %v330 = vmul.f32 %v328, %v220
    %v331 = vadd.f32 %v326, %v329
    %v332 = vadd.f32 %v327, %v330
    %v333 = vstv %s69
    %v334 = vmul.f32 %v333, %v232
    %v335 = vmul.f32 %v333, %v233
    %v336 = vadd.f32 %v331, %v334
    %v337 = vadd.f32 %v332, %v335
    %v338 = vstv %s70
    %v339 = vmul.f32 %v338, %v245
    %v340 = vmul.f32 %v338, %v246
    %v341 = vadd.f32 %v336, %v339
    %v342 = vadd.f32 %v337, %v340
    %v343 = vstv %s71
    %v344 = vmul.f32 %v343, %v258
    %v345 = vmul.f32 %v343, %v259
    %v346 = vadd.f32 %v341, %v344
    %v347 = vadd.f32 %v342, %v345
    %v348 = vstv %s72
    %v349 = vmul.f32 %v348, %v271
    %v350 = vmul.f32 %v348, %v272
    %v351 = vadd.f32 %v346, %v349
    %v352 = vadd.f32 %v347, %v350
    %v353 = vstv %s73
    %v354 = vmul.f32 %v353, %v284
    %v355 = vmul.f32 %v353, %v285
    %v356 = vadd.f32 %v351, %v354
    %v357 = vadd.f32 %v352, %v355
    %v358 = vstv %s74
    %v359 = vmul.f32 %v358, %v297
    %v360 = vmul.f32 %v358, %v298
    %v361 = vadd.f32 %v356, %v359
    %v362 = vadd.f32 %v357, %v360
    %v363 = vstv %s75
    %v364 = vmul.f32 %v363, %v310
    %v365 = vmul.f32 %v363, %v311
    %v366 = vadd.f32 %v361, %v364
    %v367 = vadd.f32 %v362, %v365
    %v368 = vstv %s76
    %v369 = vmul.f32 %v368, %v323
    %v370 = vmul.f32 %v368, %v324
    %v371 = vadd.f32 %v366, %v369
    %v372 = vadd.f32 %v367, %v370
    %v373 = vstv %s167
    %v374 = vadd.f32 %v371, %v373
    %v375 = vadd.f32 %v372, %v373
    %v376 = vmax.f32 %v374, 0.0
    %v377 = vmax.f32 %v375, 0.0
    %v378 = vstv %s177
    %v379 = vmul.f32 %v378, %v376
    %v380 = vmul.f32 %v378, %v377
    %v381 = vstv %s77
    %v382 = vmul.f32 %v381, %v206
    %v383 = vmul.f32 %v381, %v207
    %v384 = vstv %s78
    %v385 = vmul.f32 %v384, %v219
    %v386 = vmul.f32 %v384, %v220
    %v387 = vadd.f32 %v382, %v385
    %v388 = vadd.f32 %v383, %v386
    %v389 = vstv %s79
    %v390 = vmul.f32 %v389, %v232
    %v391 = vmul.f32 %v389, %v233
    %v392 = vadd.f32 %v387, %v390
    %v393 = vadd.f32 %v388, %v391
    %v394 = vstv %s80
    %v395 = vmul.f32 %v394, %v245
    %v396 = vmul.f32 %v394, %v246
    %v397 = vadd.f32 %v392, %v395
    %v398 = vadd.f32 %v393, %v396
    %v399 = vstv %s81
    %v400 = vmul.f32 %v399, %v258
    %v401 = vmul.f32 %v399, %v259
    %v402 = vadd.f32 %v397, %v400
    %v403 = vadd.f32 %v398, %v401
    %v404 = vstv %s82
    %v405 = vmul.f32 %v404, %v271
    %v406 = vmul.f32 %v404, %v272
    %v407 = vadd.f32 %v402, %v405
    %v408 = vadd.f32 %v403, %v406
    %v409 = vstv %s83
    %v410 = vmul.f32 %v409, %v284
    %v411 = vmul.f32 %v409, %v285
    %v412 = vadd.f32 %v407, %v410
    %v413 = vadd.f32 %v408, %v411
    %v414 = vstv %s84
    %v415 = vmul.f32 %v414, %v297
    %v416 = vmul.f32 %v414, %v298
    %v417 = vadd.f32 %v412, %v415
    %v418 = vadd.f32 %v413, %v416
    %v419 = vstv %s85
    %v420 = vmul.f32 %v419, %v310
    %v421 = vmul.f32 %v419, %v311
    %v422 = vadd.f32 %v417, %v420
    %v423 = vadd.f32 %v418, %v421
    %v424 = vstv %s86
    %v425 = vmul.f32 %v424, %v323
    %v426 = vmul.f32 %v424, %v324
    %v427 = vadd.f32 %v422, %v425
    %v428 = vadd.f32 %v423, %v426
    %v429 = vstv %s168
    %v430 = vadd.f32 %v427, %v429
    %v431 = vadd.f32 %v428, %v429
    %v432 = vmax.f32 %v430, 0.0
    %v433 = vmax.f32 %v431, 0.0
    %v434 = vstv %s178
    %v435 = vmul.f32 %v434, %v432
    %v436 = vmul.f32 %v434, %v433
    %v437 = vadd.f32 %v379, %v435
    %v438 = vadd.f32 %v380, %v436
    %v439 = vstv %s87
    %v440 = vmul.f32 %v439, %v206
    %v441 = vmul.f32 %v439, %v207
    %v442 = vstv %s88
    %v443 = vmul.f32 %v442, %v219
    %v444 = vmul.f32 %v442, %v220
    %v445 = vadd.f32 %v440, %v443
    %v446 = vadd.f32 %v441, %v444
    %v447 = vstv %s89
    %v448 = vmul.f32 %v447, %v232
    %v449 = vmul.f32 %v447, %v233
    %v450 = vadd.f32 %v445, %v448
    %v451 = vadd.f32 %v446, %v449
    %v452 = vstv %s90
    %v453 = vmul.f32 %v452, %v245
    %v454 = vmul.f32 %v452, %v246
    %v455 = vadd.f32 %v450, %v453
    %v456 = vadd.f32 %v451, %v454
    %v457 = vstv %s91
    %v458 = vmul.f32 %v457, %v258
    %v459 = vmul.f32 %v457, %v259
    %v460 = vadd.f32 %v455, %v458
    %v461 = vadd.f32 %v456, %v459
    %v462 = vstv %s92
    %v463 = vmul.f32 %v462, %v271
    %v464 = vmul.f32 %v462, %v272
    %v465 = vadd.f32 %v460, %v463
    %v466 = vadd.f32 %v461, %v464
    %v467 = vstv %s93
    %v468 = vmul.f32 %v467, %v284
    %v469 = vmul.f32 %v467, %v285
    %v470 = vadd.f32 %v465, %v468
    %v471 = vadd.f32 %v466, %v469
    %v472 = vstv %s94
    %v473 = vmul.f32 %v472, %v297
    %v474 = vmul.f32 %v472, %v298
    %v475 = vadd.f32 %v470, %v473
    %v476 = vadd.f32 %v471, %v474
    %v477 = vstv %s95
    %v478 = vmul.f32 %v477, %v310
    %v479 = vmul.f32 %v477, %v311
    %v480 = vadd.f32 %v475, %v478
    %v481 = vadd.f32 %v476, %v479
    %v482 = vstv %s96
    %v483 = vmul.f32 %v482, %v323
    %v484 = vmul.f32 %v482, %v324
    %v485 = vadd.f32 %v480, %v483
    %v486 = vadd.f32 %v481, %v484
    %v487 = vstv %s169
    %v488 = vadd.f32 %v485, %v487
    %v489 = vadd.f32 %v486, %v487
    %v490 = vmax.f32 %v488, 0.0
    %v491 = vmax.f32 %v489, 0.0
    %v492 = vstv %s179
    %v493 = vmul.f32 %v492, %v490
    %v494 = vmul.f32 %v492, %v491
    %v495 = vadd.f32 %v437, %v493
    %v496 = vadd.f32 %v438, %v494
    %v497 = vstv %s97
    %v498 = vmul.f32 %v497, %v206
    %v499 = vmul.f32 %v497, %v207
    %v500 = vstv %s98
    %v501 = vmul.f32 %v500, %v219
    %v502 = vmul.f32 %v500, %v220
    %v503 = vadd.f32 %v498, %v501
    %v504 = vadd.f32 %v499, %v502
    %v505 = vstv %s99
    %v506 = vmul.f32 %v505, %v232
    %v507 = vmul.f32 %v505, %v233
    %v508 = vadd.f32 %v503, %v506
    %v509 = vadd.f32 %v504, %v507
    %v510 = vstv %s100
    %v511 = vmul.f32 %v510, %v245
    %v512 = vmul.f32 %v510, %v246
    %v513 = vadd.f32 %v508, %v511
    %v514 = vadd.f32 %v509, %v512
    %v515 = vstv %s101
    %v516 = vmul.f32 %v515, %v258
    %v517 = vmul.f32 %v515, %v259
    %v518 = vadd.f32 %v513, %v516
    %v519 = vadd.f32 %v514, %v517
    %v520 = vstv %s102
    %v521 = vmul.f32 %v520, %v271
    %v522 = vmul.f32 %v520, %v272
    %v523 = vadd.f32 %v518, %v521
    %v524 = vadd.f32 %v519, %v522
    %v525 = vstv %s103
    %v526 = vmul.f32 %v525, %v284
    %v527 = vmul.f32 %v525, %v285
    %v528 = vadd.f32 %v523, %v526
    %v529 = vadd.f32 %v524, %v527
    %v530 = vstv %s104
    %v531 = vmul.f32 %v530, %v297
    %v532 = vmul.f32 %v530, %v298
    %v533 = vadd.f32 %v528, %v531
    %v534 = vadd.f32 %v529, %v532
    %v535 = vstv %s105
    %v536 = vmul.f32 %v535, %v310
    %v537 = vmul.f32 %v535, %v311
    %v538 = vadd.f32 %v533, %v536
    %v539 = vadd.f32 %v534, %v537
    %v540 = vstv %s106
    %v541 = vmul.f32 %v540, %v323
    %v542 = vmul.f32 %v540, %v324
    %v543 = vadd.f32 %v538, %v541
    %v544 = vadd.f32 %v539, %v542
    %v545 = vstv %s170
    %v546 = vadd.f32 %v543, %v545
    %v547 = vadd.f32 %v544, %v545
    %v548 = vmax.f32 %v546, 0.0
    %v549 = vmax.f32 %v547, 0.0
    %v550 = vstv %s180
    %v551 = vmul.f32 %v550, %v548
    %v552 = vmul.f32 %v550, %v549
    %v553 = vadd.f32 %v495, %v551
    %v554 = vadd.f32 %v496, %v552
    %v555 = vstv %s107
    %v556 = vmul.f32 %v555, %v206
    %v557 = vmul.f32 %v555, %v207
    %v558 = vstv %s108
    %v559 = vmul.f32 %v558, %v219
    %v560 = vmul.f32 %v558, %v220
    %v561 = vadd.f32 %v556, %v559
    %v562 = vadd.f32 %v557, %v560
    %v563 = vstv %s109
    %v564 = vmul.f32 %v563, %v232
    %v565 = vmul.f32 %v563, %v233
    %v566 = vadd.f32 %v561, %v564
    %v567 = vadd.f32 %v562, %v565
    %v568 = vstv %s110
    %v569 = vmul.f32 %v568, %v245
    %v570 = vmul.f32 %v568, %v246
    %v571 = vadd.f32 %v566, %v569
    %v572 = vadd.f32 %v567, %v570
    %v573 = vstv %s111
    %v574 = vmul.f32 %v573, %v258
    %v575 = vmul.f32 %v573, %v259
    %v576 = vadd.f32 %v571, %v574
    %v577 = vadd.f32 %v572, %v575
    %v578 = vstv %s112
    %v579 = vmul.f32 %v578, %v271
    %v580 = vmul.f32 %v578, %v272
    %v581 = vadd.f32 %v576, %v579
    %v582 = vadd.f32 %v577, %v580
    %v583 = vstv %s113
    %v584 = vmul.f32 %v583, %v284
    %v585 = vmul.f32 %v583, %v285
    %v586 = vadd.f32 %v581, %v584
    %v587 = vadd.f32 %v582, %v585
    %v588 = vstv %s114
    %v589 = vmul.f32 %v588, %v297
    %v590 = vmul.f32 %v588, %v298
    %v591 = vadd.f32 %v586, %v589
    %v592 = vadd.f32 %v587, %v590
    %v593 = vstv %s115
    %v594 = vmul.f32 %v593, %v310
    %v595 = vmul.f32 %v593, %v311
    %v596 = vadd.f32 %v591, %v594
    %v597 = vadd.f32 %v592, %v595
    %v598 = vstv %s116
    %v599 = vmul.f32 %v598, %v323
    %v600 = vmul.f32 %v598, %v324
    %v601 = vadd.f32 %v596, %v599
    %v602 = vadd.f32 %v597, %v600
    %v603 = vstv %s171
    %v604 = vadd.f32 %v601, %v603
    %v605 = vadd.f32 %v602, %v603
    %v606 = vmax.f32 %v604, 0.0
    %v607 = vmax.f32 %v605, 0.0
    %v608 = vstv %s181
    %v609 = vmul.f32 %v608, %v606
    %v610 = vmul.f32 %v608, %v607
    %v611 = vadd.f32 %v553, %v609
    %v612 = vadd.f32 %v554, %v610
    %v613 = vstv %s117
    %v614 = vmul.f32 %v613, %v206
    %v615 = vmul.f32 %v613, %v207
    %v616 = vstv %s118
    %v617 = vmul.f32 %v616, %v219
    %v618 = vmul.f32 %v616, %v220
    %v619 = vadd.f32 %v614, %v617
    %v620 = vadd.f32 %v615, %v618
    %v621 = vstv %s119
    %v622 = vmul.f32 %v621, %v232
    %v623 = vmul.f32 %v621, %v233
    %v624 = vadd.f32 %v619, %v622
    %v625 = vadd.f32 %v620, %v623
    %v626 = vstv %s120
    %v627 = vmul.f32 %v626, %v245
    %v628 = vmul.f32 %v626, %v246
    %v629 = vadd.f32 %v624, %v627
    %v630 = vadd.f32 %v625, %v628
    %v631 = vstv %s121
    %v632 = vmul.f32 %v631, %v258
    %v633 = vmul.f32 %v631, %v259
    %v634 = vadd.f32 %v629, %v632
    %v635 = vadd.f32 %v630, %v633
    %v636 = vstv %s122
    %v637 = vmul.f32 %v636, %v271
    %v638 = vmul.f32 %v636, %v272
    %v639 = vadd.f32 %v634, %v637
    %v640 = vadd.f32 %v635, %v638
    %v641 = vstv %s123
    %v642 = vmul.f32 %v641, %v284
    %v643 = vmul.f32 %v641, %v285
    %v644 = vadd.f32 %v639, %v642
    %v645 = vadd.f32 %v640, %v643
    %v646 = vstv %s124
    %v647 = vmul.f32 %v646, %v297
    %v648 = vmul.f32 %v646, %v298
    %v649 = vadd.f32 %v644, %v647
    %v650 = vadd.f32 %v645, %v648
    %v651 = vstv %s125
    %v652 = vmul.f32 %v651, %v310
    %v653 = vmul.f32 %v651, %v311
    %v654 = vadd.f32 %v649, %v652
    %v655 = vadd.f32 %v650, %v653
    %v656 = vstv %s126
    %v657 = vmul.f32 %v656, %v323
    %v658 = vmul.f32 %v656, %v324
    %v659 = vadd.f32 %v654, %v657
    %v660 = vadd.f32 %v655, %v658
    %v661 = vstv %s172
    %v662 = vadd.f32 %v659, %v661
    %v663 = vadd.f32 %v660, %v661
    %v664 = vmax.f32 %v662, 0.0
    %v665 = vmax.f32 %v663, 0.0
    %v666 = vstv %s182
    %v667 = vmul.f32 %v666, %v664
    %v668 = vmul.f32 %v666, %v665
    %v669 = vadd.f32 %v611, %v667
    %v670 = vadd.f32 %v612, %v668
    %v671 = vstv %s127
    %v672 = vmul.f32 %v671, %v206
    %v673 = vmul.f32 %v671, %v207
    %v674 = vstv %s128
    %v675 = vmul.f32 %v674, %v219
    %v676 = vmul.f32 %v674, %v220
    %v677 = vadd.f32 %v672, %v675
    %v678 = vadd.f32 %v673, %v676
    %v679 = vstv %s129
    %v680 = vmul.f32 %v679, %v232
    %v681 = vmul.f32 %v679, %v233
    %v682 = vadd.f32 %v677, %v680
    %v683 = vadd.f32 %v678, %v681
    %v684 = vstv %s130
    %v685 = vmul.f32 %v684, %v245
    %v686 = vmul.f32 %v684, %v246
    %v687 = vadd.f32 %v682, %v685
    %v688 = vadd.f32 %v683, %v686
    %v689 = vstv %s131
    %v690 = vmul.f32 %v689, %v258
    %v691 = vmul.f32 %v689, %v259
    %v692 = vadd.f32 %v687, %v690
    %v693 = vadd.f32 %v688, %v691
    %v694 = vstv %s132
    %v695 = vmul.f32 %v694, %v271
    %v696 = vmul.f32 %v694, %v272
    %v697 = vadd.f32 %v692, %v695
    %v698 = vadd.f32 %v693, %v696
    %v699 = vstv %s133
    %v700 = vmul.f32 %v699, %v284
    %v701 = vmul.f32 %v699, %v285
    %v702 = vadd.f32 %v697, %v700
    %v703 = vadd.f32 %v698, %v701
    %v704 = vstv %s134
    %v705 = vmul.f32 %v704, %v297
    %v706 = vmul.f32 %v704, %v298
    %v707 = vadd.f32 %v702, %v705
    %v708 = vadd.f32 %v703, %v706
    %v709 = vstv %s135
    %v710 = vmul.f32 %v709, %v310
    %v711 = vmul.f32 %v709, %v311
    %v712 = vadd.f32 %v707, %v710
    %v713 = vadd.f32 %v708, %v711
    %v714 = vstv %s136
    %v715 = vmul.f32 %v714, %v323
    %v716 = vmul.f32 %v714, %v324
    %v717 = vadd.f32 %v712, %v715
    %v718 = vadd.f32 %v713, %v716
    %v719 = vstv %s173
    %v720 = vadd.f32 %v717, %v719
    %v721 = vadd.f32 %v718, %v719
    %v722 = vmax.f32 %v720, 0.0
    %v723 = vmax.f32 %v721, 0.0
    %v724 = vstv %s183
    %v725 = vmul.f32 %v724, %v722
    %v726 = vmul.f32 %v724, %v723
    %v727 = vadd.f32 %v669, %v725
    %v728 = vadd.f32 %v670, %v726
    %v729 = vstv %s137
    %v730 = vmul.f32 %v729, %v206
    %v731 = vmul.f32 %v729, %v207
    %v732 = vstv %s138
    %v733 = vmul.f32 %v732, %v219
    %v734 = vmul.f32 %v732, %v220
    %v735 = vadd.f32 %v730, %v733
    %v736 = vadd.f32 %v731, %v734
    %v737 = vstv %s139
    %v738 = vmul.f32 %v737, %v232
    %v739 = vmul.f32 %v737, %v233
    %v740 = vadd.f32 %v735, %v738
    %v741 = vadd.f32 %v736, %v739
    %v742 = vstv %s140
    %v743 = vmul.f32 %v742, %v245
    %v744 = vmul.f32 %v742, %v246
    %v745 = vadd.f32 %v740, %v743
    %v746 = vadd.f32 %v741, %v744
    %v747 = vstv %s141
    %v748 = vmul.f32 %v747, %v258
    %v749 = vmul.f32 %v747, %v259
    %v750 = vadd.f32 %v745, %v748
    %v751 = vadd.f32 %v746, %v749
    %v752 = vstv %s142
    %v753 = vmul.f32 %v752, %v271
    %v754 = vmul.f32 %v752, %v272
    %v755 = vadd.f32 %v750, %v753
    %v756 = vadd.f32 %v751, %v754
    %v757 = vstv %s143
    %v758 = vmul.f32 %v757, %v284
    %v759 = vmul.f32 %v757, %v285
    %v760 = vadd.f32 %v755, %v758
    %v761 = vadd.f32 %v756, %v759
    %v762 = vstv %s144
    %v763 = vmul.f32 %v762, %v297
    %v764 = vmul.f32 %v762, %v298
    %v765 = vadd.f32 %v760, %v763
    %v766 = vadd.f32 %v761, %v764
    %v767 = vstv %s145
    %v768 = vmul.f32 %v767, %v310
    %v769 = vmul.f32 %v767, %v311
    %v770 = vadd.f32 %v765, %v768
    %v771 = vadd.f32 %v766, %v769
    %v772 = vstv %s146
    %v773 = vmul.f32 %v772, %v323
    %v774 = vmul.f32 %v772, %v324
    %v775 = vadd.f32 %v770, %v773
    %v776 = vadd.f32 %v771, %v774
    %v777 = vstv %s174
    %v778 = vadd.f32 %v775, %v777
    %v779 = vadd.f32 %v776, %v777
    %v780 = vmax.f32 %v778, 0.0
    %v781 = vmax.f32 %v779, 0.0
    %v782 = vstv %s184
    %v783 = vmul.f32 %v782, %v780
    %v784 = vmul.f32 %v782, %v781
    %v785 = vadd.f32 %v727, %v783
    %v786 = vadd.f32 %v728, %v784
    %v787 = vstv %s147
    %v788 = vmul.f32 %v787, %v206
    %v789 = vmul.f32 %v787, %v207
    %v790 = vstv %s148
    %v791 = vmul.f32 %v790, %v219
    %v792 = vmul.f32 %v790, %v220
    %v793 = vadd.f32 %v788, %v791
    %v794 = vadd.f32 %v789, %v792
    %v795 = vstv %s149
    %v796 = vmul.f32 %v795, %v232
    %v797 = vmul.f32 %v795, %v233
    %v798 = vadd.f32 %v793, %v796
    %v799 = vadd.f32 %v794, %v797
    %v800 = vstv %s150
    %v801 = vmul.f32 %v800, %v245
    %v802 = vmul.f32 %v800, %v246
    %v803 = vadd.f32 %v798, %v801
    %v804 = vadd.f32 %v799, %v802
    %v805 = vstv %s151
    %v806 = vmul.f32 %v805, %v258
    %v807 = vmul.f32 %v805, %v259
    %v808 = vadd.f32 %v803, %v806
    %v809 = vadd.f32 %v804, %v807
    %v810 = vstv %s152
    %v811 = vmul.f32 %v810, %v271
    %v812 = vmul.f32 %v810, %v272
    %v813 = vadd.f32 %v808, %v811
    %v814 = vadd.f32 %v809, %v812
    %v815 = vstv %s153
    %v816 = vmul.f32 %v815, %v284
    %v817 = vmul.f32 %v815, %v285
    %v818 = vadd.f32 %v813, %v816
    %v819 = vadd.f32 %v814, %v817
    %v820 = vstv %s154
    %v821 = vmul.f32 %v820, %v297
    %v822 = vmul.f32 %v820, %v298
    %v823 = vadd.f32 %v818, %v821
    %v824 = vadd.f32 %v819, %v822
    %v825 = vstv %s155
    %v826 = vmul.f32 %v825, %v310
    %v827 = vmul.f32 %v825, %v311
    %v828 = vadd.f32 %v823, %v826
    %v829 = vadd.f32 %v824, %v827
    %v830 = vstv %s156
    %v831 = vmul.f32 %v830, %v323
    %v832 = vmul.f32 %v830, %v324
    %v833 = vadd.f32 %v828, %v831
    %v834 = vadd.f32 %v829, %v832
    %v835 = vstv %s175
    %v836 = vadd.f32 %v833, %v835
    %v837 = vadd.f32 %v834, %v835
    %v838 = vmax.f32 %v836, 0.0
    %v839 = vmax.f32 %v837, 0.0
    %v840 = vstv %s185
    %v841 = vmul.f32 %v840, %v838
    %v842 = vmul.f32 %v840, %v839
    %v843 = vadd.f32 %v785, %v841
    %v844 = vadd.f32 %v786, %v842
    %v845 = vstv %s157
    %v846 = vmul.f32 %v845, %v206
    %v847 = vmul.f32 %v845, %v207
    %v848 = vstv %s158
    %v849 = vmul.f32 %v848, %v219
    %v850 = vmul.f32 %v848, %v220
    %v851 = vadd.f32 %v846, %v849
    %v852 = vadd.f32 %v847, %v850
    %v853 = vstv %s159
    %v854 = vmul.f32 %v853, %v232
    %v855 = vmul.f32 %v853, %v233
    %v856 = vadd.f32 %v851, %v854
    %v857 = vadd.f32 %v852, %v855
    %v858 = vstv %s160
    %v859 = vmul.f32 %v858, %v245
    %v860 = vmul.f32 %v858, %v246
    %v861 = vadd.f32 %v856, %v859
    %v862 = vadd.f32 %v857, %v860
    %v863 = vstv %s161
    %v864 = vmul.f32 %v863, %v258
    %v865 = vmul.f32 %v863, %v259
    %v866 = vadd.f32 %v861, %v864
    %v867 = vadd.f32 %v862, %v865
    %v868 = vstv %s162
    %v869 = vmul.f32 %v868, %v271
    %v870 = vmul.f32 %v868, %v272
    %v871 = vadd.f32 %v866, %v869
    %v872 = vadd.f32 %v867, %v870
    %v873 = vstv %s163
    %v874 = vmul.f32 %v873, %v284
    %v875 = vmul.f32 %v873, %v285
    %v876 = vadd.f32 %v871, %v874
    %v877 = vadd.f32 %v872, %v875
    %v878 = vstv %s164
    %v879 = vmul.f32 %v878, %v297
    %v880 = vmul.f32 %v878, %v298
    %v881 = vadd.f32 %v876, %v879
    %v882 = vadd.f32 %v877, %v880
    %v883 = vstv %s165
    %v884 = vmul.f32 %v883, %v310
    %v885 = vmul.f32 %v883, %v311
    %v886 = vadd.f32 %v881, %v884
    %v887 = vadd.f32 %v882, %v885
    %v888 = vstv %s166
    %v889 = vmul.f32 %v888, %v323
    %v890 = vmul.f32 %v888, %v324
    %v891 = vadd.f32 %v886, %v889
    %v892 = vadd.f32 %v887, %v890
    %v893 = vstv %s176
    %v894 = vadd.f32 %v891, %v893
    %v895 = vadd.f32 %v892, %v893
    %v896 = vmax.f32 %v894, 0.0
    %v897 = vmax.f32 %v895, 0.0
    %v898 = vstv %s186
    %v899 = vmul.f32 %v898, %v896
    %v900 = vmul.f32 %v898, %v897
    %v901 = vadd.f32 %v843, %v899
    %v902 = vadd.f32 %v844, %v900
    %v903 = vstv %s187
    %v904 = vadd.f32 %v901, %v903
    %v905 = vadd.f32 %v902, %v903
    %906 = vst [vmem:[#allocation7] sm:$0xff] %v904
    %907 = vst [vmem:[#allocation7 + $0x8] sm:$0xff] %v905
    // Predicated region
    $region18: #{tpu_custom_call.1} parent=1 // pred_check
      _
    $region19: #{tpu_custom_call.1} parent=1 // pred_check_branch
      %909 = sbr.rel (0) target = $region21
    $region20: #{tpu_custom_call.1} parent=1 // pred_region
      %s911 = ssub.s32 256, 256
      %912 = vsyncadd [#allocation4], %s911
      %s914 = sshll.u32 [#allocation7], 4
      %s915 = int_to_ptr.vmem [resolvable:$true] %s914
      %917 = dma.vmem_to_hbm [thread:$0]  %s915, 256, %s2, [#allocation4]
    $region21: #{tpu_custom_call.1} parent=1 // pred_fallthru
      _
    // Predicated region
    $region22: #{tpu_custom_call.1} parent=1 // pred_check
      _
    $region23: #{tpu_custom_call.1} parent=1 // pred_check_branch
      %919 = sbr.rel (0) target = $region25
    $region24: #{tpu_custom_call.1} parent=1 // pred_region
      %920 = dma.done [#allocation4], 256
    $region25: #{tpu_custom_call.1} parent=1 // pred_fallthru
      _
    %921 = vsyncpa [#allocation3], 1
    %922 = vsyncpa [#allocation4], 1
    %923 = vsyncpa [#allocation5], 1

</llo_original>
